<compile_context>
chip_gen: v5e
topology: v5e:2x2
jax: 0.10.0
libtpu: 0.0.40
codegen_flags: <defaults>
</compile_context>

<pallas_src>
import numpy as np
import jax
import jax.numpy as jnp
from jax import lax
from jax.experimental import pallas as pl
from jax.experimental.pallas import tpu as pltpu

_HI = jax.lax.Precision.HIGHEST  # reference only


# ----------------------------- Pallas kernel ------------------------------- #
def _encoder_kernel(src_ref, wih0_ref, whh_ref, wihr_ref, b_ref, h_ref, c_ref):
    """Full-sequence stacked LSTM; final hidden/cell written to h_ref/c_ref.

    Ref shapes (all VMEM, full-array blocks):
      src_ref  : (T*B, E)            time-major step inputs, row = t*B + b
      wih0_ref : (E, 4H)             layer-0 W_ih.T           (gates i|f|g|o)
      whh_ref  : (L, H, 4H)          all layers' W_hh.T
      wihr_ref : (max(L-1,1), H, 4H) W_ih.T for layers 1..L-1 (dummy if L==1)
      b_ref    : (L, 1, 4H)          combined b_ih + b_hh
      h_ref    : (L, B, H)           output final hidden
      c_ref    : (L, B, H)           output final cell
    """
    L, B, H = h_ref.shape
    TB, E = src_ref.shape
    T = TB // B
    H4 = 4 * H

    # Hoisted lane mask / scale selecting the "g" (cell candidate) lanes of the
    # fused (B, 4H) gate block.
    lane = lax.broadcasted_iota(jnp.int32, (B, H4), 1)
    is_g = (lane >= 2 * H) & (lane < 3 * H)
    pre_scale = jnp.where(is_g, jnp.float32(1.0), jnp.float32(0.5))

    # Hoist all weights / biases out of the time loop (loop-invariant values).
    wih0 = wih0_ref[...]                                  # (E, 4H)
    whh = [whh_ref[l] for l in range(L)]                  # each (H, 4H)
    wihr = [wihr_ref[l - 1] for l in range(1, L)]         # each (H, 4H)
    bias = [b_ref[l] for l in range(L)]                   # each (1, 4H)

    # Precompute layer-0 input contribution for ALL timesteps in one MXU op.
    x0g_all = jnp.dot(src_ref[...], wih0,
                      preferred_element_type=jnp.float32) + bias[0]   # (T*B, 4H)

    def gate_act(gates):
        # tanh on g lanes, sigmoid on i/f/o lanes with a single tanh pass:
        # sigmoid(z) = 0.5 * tanh(z / 2) + 0.5
        th = jnp.tanh(gates * pre_scale)
        return jnp.where(is_g, th, 0.5 * th + 0.5)

    # h/c state carried as values (vregs); refs written once at the end.
    h = [jnp.zeros((B, H), jnp.float32) for _ in range(L)]
    c = [jnp.zeros((B, H), jnp.float32) for _ in range(L)]

    for t in range(T):                                    # fully unrolled
        x = None
        for l in range(L):                                # static layer loop
            if l == 0:
                gates = (x0g_all[t * B:(t + 1) * B, :]
                         + jnp.dot(h[0], whh[0],
                                   preferred_element_type=jnp.float32))
            else:
                gates = (jnp.dot(x, wihr[l - 1],
                                 preferred_element_type=jnp.float32)
                         + jnp.dot(h[l], whh[l],
                                   preferred_element_type=jnp.float32)
                         + bias[l])

            act = gate_act(gates)                         # (B, 4H)
            i_g = act[:, 0 * H:1 * H]
            f_g = act[:, 1 * H:2 * H]
            g_g = act[:, 2 * H:3 * H]
            o_g = act[:, 3 * H:4 * H]

            c[l] = f_g * c[l] + i_g * g_g
            h[l] = o_g * jnp.tanh(c[l])
            x = h[l]                                      # feeds next layer

    for l in range(L):
        h_ref[l] = h[l]
        c_ref[l] = c[l]


# ------------------------------- wrapper ----------------------------------- #
def encoder_forward(src, params):
    """src: (B, T, E) float32 -> (hidden, cell), each (L, B, H)."""
    B, T, E = src.shape
    L = params["b"].shape[0]
    H = params["b"].shape[2] // 4

    # Time-major, flattened so row index = t*B + b (layout plumbing done in XLA).
    src_flat = jnp.transpose(src, (1, 0, 2)).reshape(T * B, E)

    vmem = lambda: pl.BlockSpec(memory_space=pltpu.MemorySpace.VMEM)
    hidden, cell = pl.pallas_call(
        _encoder_kernel,
        out_shape=(jax.ShapeDtypeStruct((L, B, H), jnp.float32),
                   jax.ShapeDtypeStruct((L, B, H), jnp.float32)),
        in_specs=[vmem() for _ in range(5)],
        out_specs=(vmem(), vmem()),
        compiler_params=pltpu.CompilerParams(
            vmem_limit_bytes=32 * 1024 * 1024),
    )(src_flat, params["wih0"], params["whh"], params["wihr"], params["b"])
    return hidden, cell


# ------------------------- deterministic parameters ------------------------ #
def init_params(key, embedding_dim, hidden_dim, n_layers):
    E, H, L = embedding_dim, hidden_dim, n_layers
    keys = jax.random.split(key, 4 * L)
    k = 1.0 / np.sqrt(H)

    w_ih, w_hh, b_ih, b_hh = [], [], [], []
    idx = 0
    for l in range(L):
        in_dim = E if l == 0 else H
        w_ih.append(jax.random.uniform(keys[idx], (4 * H, in_dim), jnp.float32, -k, k)); idx += 1
        w_hh.append(jax.random.uniform(keys[idx], (4 * H, H), jnp.float32, -k, k));       idx += 1
        b_ih.append(jax.random.uniform(keys[idx], (4 * H,), jnp.float32, -k, k));         idx += 1
        b_hh.append(jax.random.uniform(keys[idx], (4 * H,), jnp.float32, -k, k));         idx += 1

    # Repack for the kernel: pre-transposed, lane-dense 4H gate axis.
    wih0 = w_ih[0].T                                              # (E, 4H)
    whh = jnp.stack([w_hh[l].T for l in range(L)])                # (L, H, 4H)
    if L > 1:
        wihr = jnp.stack([w_ih[l].T for l in range(1, L)])        # (L-1, H, 4H)
    else:
        wihr = jnp.zeros((1, H, 4 * H), jnp.float32)              # never read
    b = jnp.stack([(b_ih[l] + b_hh[l]).reshape(1, 4 * H) for l in range(L)])  # (L,1,4H)

    return dict(
        wih0=wih0, whh=whh, wihr=wihr, b=b,
        raw=dict(w_ih=w_ih, w_hh=w_hh, b_ih=b_ih, b_hh=b_hh),
    )


# ---------------------- pure-JAX reference (for checking) ------------------ #
def reference_forward(src, raw):
    B, T, _ = src.shape
    L = len(raw["w_ih"])
    H = raw["w_hh"][0].shape[1]
    h = [jnp.zeros((B, H), jnp.float32) for _ in range(L)]
    c = [jnp.zeros((B, H), jnp.float32) for _ in range(L)]
    for t in range(T):
        x = src[:, t, :]
        for l in range(L):
            gates = (jnp.dot(x, raw["w_ih"][l].T, precision=_HI)
                     + jnp.dot(h[l], raw["w_hh"][l].T, precision=_HI)
                     + raw["b_ih"][l] + raw["b_hh"][l])
            i, f, g, o = jnp.split(gates, 4, axis=-1)
            i, f, o = jax.nn.sigmoid(i), jax.nn.sigmoid(f), jax.nn.sigmoid(o)
            g = jnp.tanh(g)
            c[l] = f * c[l] + i * g
            h[l] = o * jnp.tanh(c[l])
            x = h[l]
    return jnp.stack(h), jnp.stack(c)


# ----------------------------------- main ----------------------------------- #
if __name__ == "__main__":
    # Encoder(input_dim, embedding_dim, hidden_dim, n_layers, dropout)
    input_dim, embedding_dim, hidden_dim, n_layers, dropout = 100, 32, 32, 2, 0.5
    B, T = 8, 8   # batch multiple of 8 sublanes

    key = jax.random.PRNGKey(0)
    ksrc, kp = jax.random.split(key)
    params = init_params(kp, embedding_dim, hidden_dim, n_layers)

    # forward(src) passes src straight into the LSTM (embedding is unused),
    # so src is the float (B, T, E) sequence the LSTM consumes.
    src = jax.random.normal(ksrc, (B, T, embedding_dim), jnp.float32)

    hidden, cell = encoder_forward(src, params)
    jax.block_until_ready((hidden, cell))

    # DEFAULT-precision (single-pass bf16) matmuls compound a small rounding
    # error through the T-step recurrence -> loose tolerance vs exact-f32 ref.
    ref_h, ref_c = reference_forward(src, params["raw"])
    np.testing.assert_allclose(np.asarray(hidden), np.asarray(ref_h), rtol=2e-2, atol=2e-2)
    np.testing.assert_allclose(np.asarray(cell), np.asarray(ref_c), rtol=2e-2, atol=2e-2)

    print("KERNEL_OK")
</pallas_src>

<mosaic_0001>
module attributes {stable_mosaic.version = 11 : i64} {
  func.func @_encoder_kernel(%arg0: memref<64x32xf32, #tpu.memory_space<vmem>>, %arg1: memref<32x128xf32, #tpu.memory_space<vmem>>, %arg2: memref<2x32x128xf32, #tpu.memory_space<vmem>>, %arg3: memref<1x32x128xf32, #tpu.memory_space<vmem>>, %arg4: memref<2x1x128xf32, #tpu.memory_space<vmem>>, %arg5: memref<2x8x32xf32, #tpu.memory_space<vmem>>, %arg6: memref<2x8x32xf32, #tpu.memory_space<vmem>>) attributes {dimension_semantics = [], scalar_prefetch = 0 : i64, scratch_operands = 0 : i64, tpu.core_type = #tpu.core_type<tc>} {
    %0 = tpu.iota {dimensions = array<i32: 1>} : vector<8x128xi32>
    %c64_i32 = arith.constant 64 : i32
    %1 = vector.broadcast %c64_i32 : i32 to vector<8x128xi32>
    %2 = arith.cmpi sge, %0, %1 : vector<8x128xi32>
    %c96_i32 = arith.constant 96 : i32
    %3 = vector.broadcast %c96_i32 : i32 to vector<8x128xi32>
    %4 = arith.cmpi slt, %0, %3 : vector<8x128xi32>
    %5 = arith.andi %2, %4 : vector<8x128xi1>
    %cst = arith.constant 1.000000e+00 : f32
    %cst_0 = arith.constant 5.000000e-01 : f32
    %6 = vector.broadcast %cst : f32 to vector<8x128xf32>
    %7 = vector.broadcast %cst_0 : f32 to vector<8x128xf32>
    %8 = arith.select %5, %6, %7 : vector<8x128xi1>, vector<8x128xf32>
    %c0 = arith.constant 0 : index
    %c0_1 = arith.constant 0 : index
    %9 = vector.load %arg1[%c0, %c0_1] : memref<32x128xf32, #tpu.memory_space<vmem>>, vector<32x128xf32>
    %c0_2 = arith.constant 0 : index
    %c0_3 = arith.constant 0 : index
    %c0_4 = arith.constant 0 : index
    %10 = vector.load %arg2[%c0_2, %c0_3, %c0_4] : memref<2x32x128xf32, #tpu.memory_space<vmem>>, vector<1x32x128xf32>
    %11 = vector.shape_cast %10 : vector<1x32x128xf32> to vector<32x128xf32>
    %c1 = arith.constant 1 : index
    %c0_5 = arith.constant 0 : index
    %c0_6 = arith.constant 0 : index
    %12 = vector.load %arg2[%c1, %c0_5, %c0_6] : memref<2x32x128xf32, #tpu.memory_space<vmem>>, vector<1x32x128xf32>
    %13 = vector.shape_cast %12 : vector<1x32x128xf32> to vector<32x128xf32>
    %c0_7 = arith.constant 0 : index
    %c0_8 = arith.constant 0 : index
    %c0_9 = arith.constant 0 : index
    %14 = vector.load %arg3[%c0_7, %c0_8, %c0_9] : memref<1x32x128xf32, #tpu.memory_space<vmem>>, vector<1x32x128xf32>
    %15 = vector.shape_cast %14 : vector<1x32x128xf32> to vector<32x128xf32>
    %c0_10 = arith.constant 0 : index
    %c0_11 = arith.constant 0 : index
    %c0_12 = arith.constant 0 : index
    %16 = vector.load %arg4[%c0_10, %c0_11, %c0_12] : memref<2x1x128xf32, #tpu.memory_space<vmem>>, vector<1x1x128xf32>
    %17 = vector.shape_cast %16 : vector<1x1x128xf32> to vector<1x128xf32>
    %c1_13 = arith.constant 1 : index
    %c0_14 = arith.constant 0 : index
    %c0_15 = arith.constant 0 : index
    %18 = vector.load %arg4[%c1_13, %c0_14, %c0_15] : memref<2x1x128xf32, #tpu.memory_space<vmem>>, vector<1x1x128xf32>
    %19 = vector.shape_cast %18 : vector<1x1x128xf32> to vector<1x128xf32>
    %c0_16 = arith.constant 0 : index
    %c0_17 = arith.constant 0 : index
    %20 = vector.load %arg0[%c0_16, %c0_17] : memref<64x32xf32, #tpu.memory_space<vmem>>, vector<64x32xf32>
    %cst_18 = arith.constant dense<0.000000e+00> : vector<64x128xf32>
    %21 = tpu.matmul %20, %9, %cst_18 {dimension_numbers = #tpu.dot_dimension_numbers<[1], [0], [0], [1], [0, 0, 1, 1], [], []>} : vector<64x32xf32>, vector<32x128xf32>, vector<64x128xf32> -> vector<64x128xf32>
    %22 = vector.broadcast %17 : vector<1x128xf32> to vector<64x128xf32>
    %23 = arith.addf %21, %22 : vector<64x128xf32>
    %cst_19 = arith.constant 0.000000e+00 : f32
    %24 = vector.broadcast %cst_19 : f32 to vector<8x32xf32>
    %cst_20 = arith.constant 0.000000e+00 : f32
    %25 = vector.broadcast %cst_20 : f32 to vector<8x32xf32>
    %cst_21 = arith.constant 0.000000e+00 : f32
    %26 = vector.broadcast %cst_21 : f32 to vector<8x32xf32>
    %cst_22 = arith.constant 0.000000e+00 : f32
    %27 = vector.broadcast %cst_22 : f32 to vector<8x32xf32>
    %28 = vector.extract_strided_slice %23 {offsets = [0, 0], sizes = [8, 128], strides = [1, 1]} : vector<64x128xf32> to vector<8x128xf32>
    %cst_23 = arith.constant dense<0.000000e+00> : vector<8x128xf32>
    %29 = tpu.matmul %24, %11, %cst_23 {dimension_numbers = #tpu.dot_dimension_numbers<[1], [0], [0], [1], [0, 0, 1, 1], [], []>} : vector<8x32xf32>, vector<32x128xf32>, vector<8x128xf32> -> vector<8x128xf32>
    %30 = arith.addf %28, %29 : vector<8x128xf32>
    %31 = arith.mulf %30, %8 : vector<8x128xf32>
    %32 = math.tanh %31 : vector<8x128xf32>
    %cst_24 = arith.constant 5.000000e-01 : f32
    %33 = vector.broadcast %cst_24 : f32 to vector<8x128xf32>
    %34 = arith.mulf %33, %32 : vector<8x128xf32>
    %cst_25 = arith.constant 5.000000e-01 : f32
    %35 = vector.broadcast %cst_25 : f32 to vector<8x128xf32>
    %36 = arith.addf %34, %35 : vector<8x128xf32>
    %37 = arith.select %5, %32, %36 : vector<8x128xi1>, vector<8x128xf32>
    %38 = vector.extract_strided_slice %37 {offsets = [0, 0], sizes = [8, 32], strides = [1, 1]} : vector<8x128xf32> to vector<8x32xf32>
    %39 = vector.extract_strided_slice %37 {offsets = [0, 32], sizes = [8, 32], strides = [1, 1]} : vector<8x128xf32> to vector<8x32xf32>
    %40 = vector.extract_strided_slice %37 {offsets = [0, 64], sizes = [8, 32], strides = [1, 1]} : vector<8x128xf32> to vector<8x32xf32>
    %41 = vector.extract_strided_slice %37 {offsets = [0, 96], sizes = [8, 32], strides = [1, 1]} : vector<8x128xf32> to vector<8x32xf32>
    %42 = arith.mulf %39, %26 : vector<8x32xf32>
    %43 = arith.mulf %38, %40 : vector<8x32xf32>
    %44 = arith.addf %42, %43 : vector<8x32xf32>
    %45 = math.tanh %44 : vector<8x32xf32>
    %46 = arith.mulf %41, %45 : vector<8x32xf32>
    %cst_26 = arith.constant dense<0.000000e+00> : vector<8x128xf32>
    %47 = tpu.matmul %46, %15, %cst_26 {dimension_numbers = #tpu.dot_dimension_numbers<[1], [0], [0], [1], [0, 0, 1, 1], [], []>} : vector<8x32xf32>, vector<32x128xf32>, vector<8x128xf32> -> vector<8x128xf32>
    %cst_27 = arith.constant dense<0.000000e+00> : vector<8x128xf32>
    %48 = tpu.matmul %25, %13, %cst_27 {dimension_numbers = #tpu.dot_dimension_numbers<[1], [0], [0], [1], [0, 0, 1, 1], [], []>} : vector<8x32xf32>, vector<32x128xf32>, vector<8x128xf32> -> vector<8x128xf32>
    %49 = arith.addf %47, %48 : vector<8x128xf32>
    %50 = vector.broadcast %19 : vector<1x128xf32> to vector<8x128xf32>
    %51 = arith.addf %49, %50 : vector<8x128xf32>
    %52 = arith.mulf %51, %8 : vector<8x128xf32>
    %53 = math.tanh %52 : vector<8x128xf32>
    %cst_28 = arith.constant 5.000000e-01 : f32
    %54 = vector.broadcast %cst_28 : f32 to vector<8x128xf32>
    %55 = arith.mulf %54, %53 : vector<8x128xf32>
    %cst_29 = arith.constant 5.000000e-01 : f32
    %56 = vector.broadcast %cst_29 : f32 to vector<8x128xf32>
    %57 = arith.addf %55, %56 : vector<8x128xf32>
    %58 = arith.select %5, %53, %57 : vector<8x128xi1>, vector<8x128xf32>
    %59 = vector.extract_strided_slice %58 {offsets = [0, 0], sizes = [8, 32], strides = [1, 1]} : vector<8x128xf32> to vector<8x32xf32>
    %60 = vector.extract_strided_slice %58 {offsets = [0, 32], sizes = [8, 32], strides = [1, 1]} : vector<8x128xf32> to vector<8x32xf32>
    %61 = vector.extract_strided_slice %58 {offsets = [0, 64], sizes = [8, 32], strides = [1, 1]} : vector<8x128xf32> to vector<8x32xf32>
    %62 = vector.extract_strided_slice %58 {offsets = [0, 96], sizes = [8, 32], strides = [1, 1]} : vector<8x128xf32> to vector<8x32xf32>
    %63 = arith.mulf %60, %27 : vector<8x32xf32>
    %64 = arith.mulf %59, %61 : vector<8x32xf32>
    %65 = arith.addf %63, %64 : vector<8x32xf32>
    %66 = math.tanh %65 : vector<8x32xf32>
    %67 = arith.mulf %62, %66 : vector<8x32xf32>
    %68 = vector.extract_strided_slice %23 {offsets = [8, 0], sizes = [8, 128], strides = [1, 1]} : vector<64x128xf32> to vector<8x128xf32>
    %cst_30 = arith.constant dense<0.000000e+00> : vector<8x128xf32>
    %69 = tpu.matmul %46, %11, %cst_30 {dimension_numbers = #tpu.dot_dimension_numbers<[1], [0], [0], [1], [0, 0, 1, 1], [], []>} : vector<8x32xf32>, vector<32x128xf32>, vector<8x128xf32> -> vector<8x128xf32>
    %70 = arith.addf %68, %69 : vector<8x128xf32>
    %71 = arith.mulf %70, %8 : vector<8x128xf32>
    %72 = math.tanh %71 : vector<8x128xf32>
    %cst_31 = arith.constant 5.000000e-01 : f32
    %73 = vector.broadcast %cst_31 : f32 to vector<8x128xf32>
    %74 = arith.mulf %73, %72 : vector<8x128xf32>
    %cst_32 = arith.constant 5.000000e-01 : f32
    %75 = vector.broadcast %cst_32 : f32 to vector<8x128xf32>
    %76 = arith.addf %74, %75 : vector<8x128xf32>
    %77 = arith.select %5, %72, %76 : vector<8x128xi1>, vector<8x128xf32>
    %78 = vector.extract_strided_slice %77 {offsets = [0, 0], sizes = [8, 32], strides = [1, 1]} : vector<8x128xf32> to vector<8x32xf32>
    %79 = vector.extract_strided_slice %77 {offsets = [0, 32], sizes = [8, 32], strides = [1, 1]} : vector<8x128xf32> to vector<8x32xf32>
    %80 = vector.extract_strided_slice %77 {offsets = [0, 64], sizes = [8, 32], strides = [1, 1]} : vector<8x128xf32> to vector<8x32xf32>
    %81 = vector.extract_strided_slice %77 {offsets = [0, 96], sizes = [8, 32], strides = [1, 1]} : vector<8x128xf32> to vector<8x32xf32>
    %82 = arith.mulf %79, %44 : vector<8x32xf32>
    %83 = arith.mulf %78, %80 : vector<8x32xf32>
    %84 = arith.addf %82, %83 : vector<8x32xf32>
    %85 = math.tanh %84 : vector<8x32xf32>
    %86 = arith.mulf %81, %85 : vector<8x32xf32>
    %cst_33 = arith.constant dense<0.000000e+00> : vector<8x128xf32>
    %87 = tpu.matmul %86, %15, %cst_33 {dimension_numbers = #tpu.dot_dimension_numbers<[1], [0], [0], [1], [0, 0, 1, 1], [], []>} : vector<8x32xf32>, vector<32x128xf32>, vector<8x128xf32> -> vector<8x128xf32>
    %cst_34 = arith.constant dense<0.000000e+00> : vector<8x128xf32>
    %88 = tpu.matmul %67, %13, %cst_34 {dimension_numbers = #tpu.dot_dimension_numbers<[1], [0], [0], [1], [0, 0, 1, 1], [], []>} : vector<8x32xf32>, vector<32x128xf32>, vector<8x128xf32> -> vector<8x128xf32>
    %89 = arith.addf %87, %88 : vector<8x128xf32>
    %90 = vector.broadcast %19 : vector<1x128xf32> to vector<8x128xf32>
    %91 = arith.addf %89, %90 : vector<8x128xf32>
    %92 = arith.mulf %91, %8 : vector<8x128xf32>
    %93 = math.tanh %92 : vector<8x128xf32>
    %cst_35 = arith.constant 5.000000e-01 : f32
    %94 = vector.broadcast %cst_35 : f32 to vector<8x128xf32>
    %95 = arith.mulf %94, %93 : vector<8x128xf32>
    %cst_36 = arith.constant 5.000000e-01 : f32
    %96 = vector.broadcast %cst_36 : f32 to vector<8x128xf32>
    %97 = arith.addf %95, %96 : vector<8x128xf32>
    %98 = arith.select %5, %93, %97 : vector<8x128xi1>, vector<8x128xf32>
    %99 = vector.extract_strided_slice %98 {offsets = [0, 0], sizes = [8, 32], strides = [1, 1]} : vector<8x128xf32> to vector<8x32xf32>
    %100 = vector.extract_strided_slice %98 {offsets = [0, 32], sizes = [8, 32], strides = [1, 1]} : vector<8x128xf32> to vector<8x32xf32>
    %101 = vector.extract_strided_slice %98 {offsets = [0, 64], sizes = [8, 32], strides = [1, 1]} : vector<8x128xf32> to vector<8x32xf32>
    %102 = vector.extract_strided_slice %98 {offsets = [0, 96], sizes = [8, 32], strides = [1, 1]} : vector<8x128xf32> to vector<8x32xf32>
    %103 = arith.mulf %100, %65 : vector<8x32xf32>
    %104 = arith.mulf %99, %101 : vector<8x32xf32>
    %105 = arith.addf %103, %104 : vector<8x32xf32>
    %106 = math.tanh %105 : vector<8x32xf32>
    %107 = arith.mulf %102, %106 : vector<8x32xf32>
    %108 = vector.extract_strided_slice %23 {offsets = [16, 0], sizes = [8, 128], strides = [1, 1]} : vector<64x128xf32> to vector<8x128xf32>
    %cst_37 = arith.constant dense<0.000000e+00> : vector<8x128xf32>
    %109 = tpu.matmul %86, %11, %cst_37 {dimension_numbers = #tpu.dot_dimension_numbers<[1], [0], [0], [1], [0, 0, 1, 1], [], []>} : vector<8x32xf32>, vector<32x128xf32>, vector<8x128xf32> -> vector<8x128xf32>
    %110 = arith.addf %108, %109 : vector<8x128xf32>
    %111 = arith.mulf %110, %8 : vector<8x128xf32>
    %112 = math.tanh %111 : vector<8x128xf32>
    %cst_38 = arith.constant 5.000000e-01 : f32
    %113 = vector.broadcast %cst_38 : f32 to vector<8x128xf32>
    %114 = arith.mulf %113, %112 : vector<8x128xf32>
    %cst_39 = arith.constant 5.000000e-01 : f32
    %115 = vector.broadcast %cst_39 : f32 to vector<8x128xf32>
    %116 = arith.addf %114, %115 : vector<8x128xf32>
    %117 = arith.select %5, %112, %116 : vector<8x128xi1>, vector<8x128xf32>
    %118 = vector.extract_strided_slice %117 {offsets = [0, 0], sizes = [8, 32], strides = [1, 1]} : vector<8x128xf32> to vector<8x32xf32>
    %119 = vector.extract_strided_slice %117 {offsets = [0, 32], sizes = [8, 32], strides = [1, 1]} : vector<8x128xf32> to vector<8x32xf32>
    %120 = vector.extract_strided_slice %117 {offsets = [0, 64], sizes = [8, 32], strides = [1, 1]} : vector<8x128xf32> to vector<8x32xf32>
    %121 = vector.extract_strided_slice %117 {offsets = [0, 96], sizes = [8, 32], strides = [1, 1]} : vector<8x128xf32> to vector<8x32xf32>
    %122 = arith.mulf %119, %84 : vector<8x32xf32>
    %123 = arith.mulf %118, %120 : vector<8x32xf32>
    %124 = arith.addf %122, %123 : vector<8x32xf32>
    %125 = math.tanh %124 : vector<8x32xf32>
    %126 = arith.mulf %121, %125 : vector<8x32xf32>
    %cst_40 = arith.constant dense<0.000000e+00> : vector<8x128xf32>
    %127 = tpu.matmul %126, %15, %cst_40 {dimension_numbers = #tpu.dot_dimension_numbers<[1], [0], [0], [1], [0, 0, 1, 1], [], []>} : vector<8x32xf32>, vector<32x128xf32>, vector<8x128xf32> -> vector<8x128xf32>
    %cst_41 = arith.constant dense<0.000000e+00> : vector<8x128xf32>
    %128 = tpu.matmul %107, %13, %cst_41 {dimension_numbers = #tpu.dot_dimension_numbers<[1], [0], [0], [1], [0, 0, 1, 1], [], []>} : vector<8x32xf32>, vector<32x128xf32>, vector<8x128xf32> -> vector<8x128xf32>
    %129 = arith.addf %127, %128 : vector<8x128xf32>
    %130 = vector.broadcast %19 : vector<1x128xf32> to vector<8x128xf32>
    %131 = arith.addf %129, %130 : vector<8x128xf32>
    %132 = arith.mulf %131, %8 : vector<8x128xf32>
    %133 = math.tanh %132 : vector<8x128xf32>
    %cst_42 = arith.constant 5.000000e-01 : f32
    %134 = vector.broadcast %cst_42 : f32 to vector<8x128xf32>
    %135 = arith.mulf %134, %133 : vector<8x128xf32>
    %cst_43 = arith.constant 5.000000e-01 : f32
    %136 = vector.broadcast %cst_43 : f32 to vector<8x128xf32>
    %137 = arith.addf %135, %136 : vector<8x128xf32>
    %138 = arith.select %5, %133, %137 : vector<8x128xi1>, vector<8x128xf32>
    %139 = vector.extract_strided_slice %138 {offsets = [0, 0], sizes = [8, 32], strides = [1, 1]} : vector<8x128xf32> to vector<8x32xf32>
    %140 = vector.extract_strided_slice %138 {offsets = [0, 32], sizes = [8, 32], strides = [1, 1]} : vector<8x128xf32> to vector<8x32xf32>
    %141 = vector.extract_strided_slice %138 {offsets = [0, 64], sizes = [8, 32], strides = [1, 1]} : vector<8x128xf32> to vector<8x32xf32>
    %142 = vector.extract_strided_slice %138 {offsets = [0, 96], sizes = [8, 32], strides = [1, 1]} : vector<8x128xf32> to vector<8x32xf32>
    %143 = arith.mulf %140, %105 : vector<8x32xf32>
    %144 = arith.mulf %139, %141 : vector<8x32xf32>
    %145 = arith.addf %143, %144 : vector<8x32xf32>
    %146 = math.tanh %145 : vector<8x32xf32>
    %147 = arith.mulf %142, %146 : vector<8x32xf32>
    %148 = vector.extract_strided_slice %23 {offsets = [24, 0], sizes = [8, 128], strides = [1, 1]} : vector<64x128xf32> to vector<8x128xf32>
    %cst_44 = arith.constant dense<0.000000e+00> : vector<8x128xf32>
    %149 = tpu.matmul %126, %11, %cst_44 {dimension_numbers = #tpu.dot_dimension_numbers<[1], [0], [0], [1], [0, 0, 1, 1], [], []>} : vector<8x32xf32>, vector<32x128xf32>, vector<8x128xf32> -> vector<8x128xf32>
    %150 = arith.addf %148, %149 : vector<8x128xf32>
    %151 = arith.mulf %150, %8 : vector<8x128xf32>
    %152 = math.tanh %151 : vector<8x128xf32>
    %cst_45 = arith.constant 5.000000e-01 : f32
    %153 = vector.broadcast %cst_45 : f32 to vector<8x128xf32>
    %154 = arith.mulf %153, %152 : vector<8x128xf32>
    %cst_46 = arith.constant 5.000000e-01 : f32
    %155 = vector.broadcast %cst_46 : f32 to vector<8x128xf32>
    %156 = arith.addf %154, %155 : vector<8x128xf32>
    %157 = arith.select %5, %152, %156 : vector<8x128xi1>, vector<8x128xf32>
    %158 = vector.extract_strided_slice %157 {offsets = [0, 0], sizes = [8, 32], strides = [1, 1]} : vector<8x128xf32> to vector<8x32xf32>
    %159 = vector.extract_strided_slice %157 {offsets = [0, 32], sizes = [8, 32], strides = [1, 1]} : vector<8x128xf32> to vector<8x32xf32>
    %160 = vector.extract_strided_slice %157 {offsets = [0, 64], sizes = [8, 32], strides = [1, 1]} : vector<8x128xf32> to vector<8x32xf32>
    %161 = vector.extract_strided_slice %157 {offsets = [0, 96], sizes = [8, 32], strides = [1, 1]} : vector<8x128xf32> to vector<8x32xf32>
    %162 = arith.mulf %159, %124 : vector<8x32xf32>
    %163 = arith.mulf %158, %160 : vector<8x32xf32>
    %164 = arith.addf %162, %163 : vector<8x32xf32>
    %165 = math.tanh %164 : vector<8x32xf32>
    %166 = arith.mulf %161, %165 : vector<8x32xf32>
    %cst_47 = arith.constant dense<0.000000e+00> : vector<8x128xf32>
    %167 = tpu.matmul %166, %15, %cst_47 {dimension_numbers = #tpu.dot_dimension_numbers<[1], [0], [0], [1], [0, 0, 1, 1], [], []>} : vector<8x32xf32>, vector<32x128xf32>, vector<8x128xf32> -> vector<8x128xf32>
    %cst_48 = arith.constant dense<0.000000e+00> : vector<8x128xf32>
    %168 = tpu.matmul %147, %13, %cst_48 {dimension_numbers = #tpu.dot_dimension_numbers<[1], [0], [0], [1], [0, 0, 1, 1], [], []>} : vector<8x32xf32>, vector<32x128xf32>, vector<8x128xf32> -> vector<8x128xf32>
    %169 = arith.addf %167, %168 : vector<8x128xf32>
    %170 = vector.broadcast %19 : vector<1x128xf32> to vector<8x128xf32>
    %171 = arith.addf %169, %170 : vector<8x128xf32>
    %172 = arith.mulf %171, %8 : vector<8x128xf32>
    %173 = math.tanh %172 : vector<8x128xf32>
    %cst_49 = arith.constant 5.000000e-01 : f32
    %174 = vector.broadcast %cst_49 : f32 to vector<8x128xf32>
    %175 = arith.mulf %174, %173 : vector<8x128xf32>
    %cst_50 = arith.constant 5.000000e-01 : f32
    %176 = vector.broadcast %cst_50 : f32 to vector<8x128xf32>
    %177 = arith.addf %175, %176 : vector<8x128xf32>
    %178 = arith.select %5, %173, %177 : vector<8x128xi1>, vector<8x128xf32>
    %179 = vector.extract_strided_slice %178 {offsets = [0, 0], sizes = [8, 32], strides = [1, 1]} : vector<8x128xf32> to vector<8x32xf32>
    %180 = vector.extract_strided_slice %178 {offsets = [0, 32], sizes = [8, 32], strides = [1, 1]} : vector<8x128xf32> to vector<8x32xf32>
    %181 = vector.extract_strided_slice %178 {offsets = [0, 64], sizes = [8, 32], strides = [1, 1]} : vector<8x128xf32> to vector<8x32xf32>
    %182 = vector.extract_strided_slice %178 {offsets = [0, 96], sizes = [8, 32], strides = [1, 1]} : vector<8x128xf32> to vector<8x32xf32>
    %183 = arith.mulf %180, %145 : vector<8x32xf32>
    %184 = arith.mulf %179, %181 : vector<8x32xf32>
    %185 = arith.addf %183, %184 : vector<8x32xf32>
    %186 = math.tanh %185 : vector<8x32xf32>
    %187 = arith.mulf %182, %186 : vector<8x32xf32>
    %188 = vector.extract_strided_slice %23 {offsets = [32, 0], sizes = [8, 128], strides = [1, 1]} : vector<64x128xf32> to vector<8x128xf32>
    %cst_51 = arith.constant dense<0.000000e+00> : vector<8x128xf32>
    %189 = tpu.matmul %166, %11, %cst_51 {dimension_numbers = #tpu.dot_dimension_numbers<[1], [0], [0], [1], [0, 0, 1, 1], [], []>} : vector<8x32xf32>, vector<32x128xf32>, vector<8x128xf32> -> vector<8x128xf32>
    %190 = arith.addf %188, %189 : vector<8x128xf32>
    %191 = arith.mulf %190, %8 : vector<8x128xf32>
    %192 = math.tanh %191 : vector<8x128xf32>
    %cst_52 = arith.constant 5.000000e-01 : f32
    %193 = vector.broadcast %cst_52 : f32 to vector<8x128xf32>
    %194 = arith.mulf %193, %192 : vector<8x128xf32>
    %cst_53 = arith.constant 5.000000e-01 : f32
    %195 = vector.broadcast %cst_53 : f32 to vector<8x128xf32>
    %196 = arith.addf %194, %195 : vector<8x128xf32>
    %197 = arith.select %5, %192, %196 : vector<8x128xi1>, vector<8x128xf32>
    %198 = vector.extract_strided_slice %197 {offsets = [0, 0], sizes = [8, 32], strides = [1, 1]} : vector<8x128xf32> to vector<8x32xf32>
    %199 = vector.extract_strided_slice %197 {offsets = [0, 32], sizes = [8, 32], strides = [1, 1]} : vector<8x128xf32> to vector<8x32xf32>
    %200 = vector.extract_strided_slice %197 {offsets = [0, 64], sizes = [8, 32], strides = [1, 1]} : vector<8x128xf32> to vector<8x32xf32>
    %201 = vector.extract_strided_slice %197 {offsets = [0, 96], sizes = [8, 32], strides = [1, 1]} : vector<8x128xf32> to vector<8x32xf32>
    %202 = arith.mulf %199, %164 : vector<8x32xf32>
    %203 = arith.mulf %198, %200 : vector<8x32xf32>
    %204 = arith.addf %202, %203 : vector<8x32xf32>
    %205 = math.tanh %204 : vector<8x32xf32>
    %206 = arith.mulf %201, %205 : vector<8x32xf32>
    %cst_54 = arith.constant dense<0.000000e+00> : vector<8x128xf32>
    %207 = tpu.matmul %206, %15, %cst_54 {dimension_numbers = #tpu.dot_dimension_numbers<[1], [0], [0], [1], [0, 0, 1, 1], [], []>} : vector<8x32xf32>, vector<32x128xf32>, vector<8x128xf32> -> vector<8x128xf32>
    %cst_55 = arith.constant dense<0.000000e+00> : vector<8x128xf32>
    %208 = tpu.matmul %187, %13, %cst_55 {dimension_numbers = #tpu.dot_dimension_numbers<[1], [0], [0], [1], [0, 0, 1, 1], [], []>} : vector<8x32xf32>, vector<32x128xf32>, vector<8x128xf32> -> vector<8x128xf32>
    %209 = arith.addf %207, %208 : vector<8x128xf32>
    %210 = vector.broadcast %19 : vector<1x128xf32> to vector<8x128xf32>
    %211 = arith.addf %209, %210 : vector<8x128xf32>
    %212 = arith.mulf %211, %8 : vector<8x128xf32>
    %213 = math.tanh %212 : vector<8x128xf32>
    %cst_56 = arith.constant 5.000000e-01 : f32
    %214 = vector.broadcast %cst_56 : f32 to vector<8x128xf32>
    %215 = arith.mulf %214, %213 : vector<8x128xf32>
    %cst_57 = arith.constant 5.000000e-01 : f32
    %216 = vector.broadcast %cst_57 : f32 to vector<8x128xf32>
    %217 = arith.addf %215, %216 : vector<8x128xf32>
    %218 = arith.select %5, %213, %217 : vector<8x128xi1>, vector<8x128xf32>
    %219 = vector.extract_strided_slice %218 {offsets = [0, 0], sizes = [8, 32], strides = [1, 1]} : vector<8x128xf32> to vector<8x32xf32>
    %220 = vector.extract_strided_slice %218 {offsets = [0, 32], sizes = [8, 32], strides = [1, 1]} : vector<8x128xf32> to vector<8x32xf32>
    %221 = vector.extract_strided_slice %218 {offsets = [0, 64], sizes = [8, 32], strides = [1, 1]} : vector<8x128xf32> to vector<8x32xf32>
    %222 = vector.extract_strided_slice %218 {offsets = [0, 96], sizes = [8, 32], strides = [1, 1]} : vector<8x128xf32> to vector<8x32xf32>
    %223 = arith.mulf %220, %185 : vector<8x32xf32>
    %224 = arith.mulf %219, %221 : vector<8x32xf32>
    %225 = arith.addf %223, %224 : vector<8x32xf32>
    %226 = math.tanh %225 : vector<8x32xf32>
    %227 = arith.mulf %222, %226 : vector<8x32xf32>
    %228 = vector.extract_strided_slice %23 {offsets = [40, 0], sizes = [8, 128], strides = [1, 1]} : vector<64x128xf32> to vector<8x128xf32>
    %cst_58 = arith.constant dense<0.000000e+00> : vector<8x128xf32>
    %229 = tpu.matmul %206, %11, %cst_58 {dimension_numbers = #tpu.dot_dimension_numbers<[1], [0], [0], [1], [0, 0, 1, 1], [], []>} : vector<8x32xf32>, vector<32x128xf32>, vector<8x128xf32> -> vector<8x128xf32>
    %230 = arith.addf %228, %229 : vector<8x128xf32>
    %231 = arith.mulf %230, %8 : vector<8x128xf32>
    %232 = math.tanh %231 : vector<8x128xf32>
    %cst_59 = arith.constant 5.000000e-01 : f32
    %233 = vector.broadcast %cst_59 : f32 to vector<8x128xf32>
    %234 = arith.mulf %233, %232 : vector<8x128xf32>
    %cst_60 = arith.constant 5.000000e-01 : f32
    %235 = vector.broadcast %cst_60 : f32 to vector<8x128xf32>
    %236 = arith.addf %234, %235 : vector<8x128xf32>
    %237 = arith.select %5, %232, %236 : vector<8x128xi1>, vector<8x128xf32>
    %238 = vector.extract_strided_slice %237 {offsets = [0, 0], sizes = [8, 32], strides = [1, 1]} : vector<8x128xf32> to vector<8x32xf32>
    %239 = vector.extract_strided_slice %237 {offsets = [0, 32], sizes = [8, 32], strides = [1, 1]} : vector<8x128xf32> to vector<8x32xf32>
    %240 = vector.extract_strided_slice %237 {offsets = [0, 64], sizes = [8, 32], strides = [1, 1]} : vector<8x128xf32> to vector<8x32xf32>
    %241 = vector.extract_strided_slice %237 {offsets = [0, 96], sizes = [8, 32], strides = [1, 1]} : vector<8x128xf32> to vector<8x32xf32>
    %242 = arith.mulf %239, %204 : vector<8x32xf32>
    %243 = arith.mulf %238, %240 : vector<8x32xf32>
    %244 = arith.addf %242, %243 : vector<8x32xf32>
    %245 = math.tanh %244 : vector<8x32xf32>
    %246 = arith.mulf %241, %245 : vector<8x32xf32>
    %cst_61 = arith.constant dense<0.000000e+00> : vector<8x128xf32>
    %247 = tpu.matmul %246, %15, %cst_61 {dimension_numbers = #tpu.dot_dimension_numbers<[1], [0], [0], [1], [0, 0, 1, 1], [], []>} : vector<8x32xf32>, vector<32x128xf32>, vector<8x128xf32> -> vector<8x128xf32>
    %cst_62 = arith.constant dense<0.000000e+00> : vector<8x128xf32>
    %248 = tpu.matmul %227, %13, %cst_62 {dimension_numbers = #tpu.dot_dimension_numbers<[1], [0], [0], [1], [0, 0, 1, 1], [], []>} : vector<8x32xf32>, vector<32x128xf32>, vector<8x128xf32> -> vector<8x128xf32>
    %249 = arith.addf %247, %248 : vector<8x128xf32>
    %250 = vector.broadcast %19 : vector<1x128xf32> to vector<8x128xf32>
    %251 = arith.addf %249, %250 : vector<8x128xf32>
    %252 = arith.mulf %251, %8 : vector<8x128xf32>
    %253 = math.tanh %252 : vector<8x128xf32>
    %cst_63 = arith.constant 5.000000e-01 : f32
    %254 = vector.broadcast %cst_63 : f32 to vector<8x128xf32>
    %255 = arith.mulf %254, %253 : vector<8x128xf32>
    %cst_64 = arith.constant 5.000000e-01 : f32
    %256 = vector.broadcast %cst_64 : f32 to vector<8x128xf32>
    %257 = arith.addf %255, %256 : vector<8x128xf32>
    %258 = arith.select %5, %253, %257 : vector<8x128xi1>, vector<8x128xf32>
    %259 = vector.extract_strided_slice %258 {offsets = [0, 0], sizes = [8, 32], strides = [1, 1]} : vector<8x128xf32> to vector<8x32xf32>
    %260 = vector.extract_strided_slice %258 {offsets = [0, 32], sizes = [8, 32], strides = [1, 1]} : vector<8x128xf32> to vector<8x32xf32>
    %261 = vector.extract_strided_slice %258 {offsets = [0, 64], sizes = [8, 32], strides = [1, 1]} : vector<8x128xf32> to vector<8x32xf32>
    %262 = vector.extract_strided_slice %258 {offsets = [0, 96], sizes = [8, 32], strides = [1, 1]} : vector<8x128xf32> to vector<8x32xf32>
    %263 = arith.mulf %260, %225 : vector<8x32xf32>
    %264 = arith.mulf %259, %261 : vector<8x32xf32>
    %265 = arith.addf %263, %264 : vector<8x32xf32>
    %266 = math.tanh %265 : vector<8x32xf32>
    %267 = arith.mulf %262, %266 : vector<8x32xf32>
    %268 = vector.extract_strided_slice %23 {offsets = [48, 0], sizes = [8, 128], strides = [1, 1]} : vector<64x128xf32> to vector<8x128xf32>
    %cst_65 = arith.constant dense<0.000000e+00> : vector<8x128xf32>
    %269 = tpu.matmul %246, %11, %cst_65 {dimension_numbers = #tpu.dot_dimension_numbers<[1], [0], [0], [1], [0, 0, 1, 1], [], []>} : vector<8x32xf32>, vector<32x128xf32>, vector<8x128xf32> -> vector<8x128xf32>
    %270 = arith.addf %268, %269 : vector<8x128xf32>
    %271 = arith.mulf %270, %8 : vector<8x128xf32>
    %272 = math.tanh %271 : vector<8x128xf32>
    %cst_66 = arith.constant 5.000000e-01 : f32
    %273 = vector.broadcast %cst_66 : f32 to vector<8x128xf32>
    %274 = arith.mulf %273, %272 : vector<8x128xf32>
    %cst_67 = arith.constant 5.000000e-01 : f32
    %275 = vector.broadcast %cst_67 : f32 to vector<8x128xf32>
    %276 = arith.addf %274, %275 : vector<8x128xf32>
    %277 = arith.select %5, %272, %276 : vector<8x128xi1>, vector<8x128xf32>
    %278 = vector.extract_strided_slice %277 {offsets = [0, 0], sizes = [8, 32], strides = [1, 1]} : vector<8x128xf32> to vector<8x32xf32>
    %279 = vector.extract_strided_slice %277 {offsets = [0, 32], sizes = [8, 32], strides = [1, 1]} : vector<8x128xf32> to vector<8x32xf32>
    %280 = vector.extract_strided_slice %277 {offsets = [0, 64], sizes = [8, 32], strides = [1, 1]} : vector<8x128xf32> to vector<8x32xf32>
    %281 = vector.extract_strided_slice %277 {offsets = [0, 96], sizes = [8, 32], strides = [1, 1]} : vector<8x128xf32> to vector<8x32xf32>
    %282 = arith.mulf %279, %244 : vector<8x32xf32>
    %283 = arith.mulf %278, %280 : vector<8x32xf32>
    %284 = arith.addf %282, %283 : vector<8x32xf32>
    %285 = math.tanh %284 : vector<8x32xf32>
    %286 = arith.mulf %281, %285 : vector<8x32xf32>
    %cst_68 = arith.constant dense<0.000000e+00> : vector<8x128xf32>
    %287 = tpu.matmul %286, %15, %cst_68 {dimension_numbers = #tpu.dot_dimension_numbers<[1], [0], [0], [1], [0, 0, 1, 1], [], []>} : vector<8x32xf32>, vector<32x128xf32>, vector<8x128xf32> -> vector<8x128xf32>
    %cst_69 = arith.constant dense<0.000000e+00> : vector<8x128xf32>
    %288 = tpu.matmul %267, %13, %cst_69 {dimension_numbers = #tpu.dot_dimension_numbers<[1], [0], [0], [1], [0, 0, 1, 1], [], []>} : vector<8x32xf32>, vector<32x128xf32>, vector<8x128xf32> -> vector<8x128xf32>
    %289 = arith.addf %287, %288 : vector<8x128xf32>
    %290 = vector.broadcast %19 : vector<1x128xf32> to vector<8x128xf32>
    %291 = arith.addf %289, %290 : vector<8x128xf32>
    %292 = arith.mulf %291, %8 : vector<8x128xf32>
    %293 = math.tanh %292 : vector<8x128xf32>
    %cst_70 = arith.constant 5.000000e-01 : f32
    %294 = vector.broadcast %cst_70 : f32 to vector<8x128xf32>
    %295 = arith.mulf %294, %293 : vector<8x128xf32>
    %cst_71 = arith.constant 5.000000e-01 : f32
    %296 = vector.broadcast %cst_71 : f32 to vector<8x128xf32>
    %297 = arith.addf %295, %296 : vector<8x128xf32>
    %298 = arith.select %5, %293, %297 : vector<8x128xi1>, vector<8x128xf32>
    %299 = vector.extract_strided_slice %298 {offsets = [0, 0], sizes = [8, 32], strides = [1, 1]} : vector<8x128xf32> to vector<8x32xf32>
    %300 = vector.extract_strided_slice %298 {offsets = [0, 32], sizes = [8, 32], strides = [1, 1]} : vector<8x128xf32> to vector<8x32xf32>
    %301 = vector.extract_strided_slice %298 {offsets = [0, 64], sizes = [8, 32], strides = [1, 1]} : vector<8x128xf32> to vector<8x32xf32>
    %302 = vector.extract_strided_slice %298 {offsets = [0, 96], sizes = [8, 32], strides = [1, 1]} : vector<8x128xf32> to vector<8x32xf32>
    %303 = arith.mulf %300, %265 : vector<8x32xf32>
    %304 = arith.mulf %299, %301 : vector<8x32xf32>
    %305 = arith.addf %303, %304 : vector<8x32xf32>
    %306 = math.tanh %305 : vector<8x32xf32>
    %307 = arith.mulf %302, %306 : vector<8x32xf32>
    %308 = vector.extract_strided_slice %23 {offsets = [56, 0], sizes = [8, 128], strides = [1, 1]} : vector<64x128xf32> to vector<8x128xf32>
    %cst_72 = arith.constant dense<0.000000e+00> : vector<8x128xf32>
    %309 = tpu.matmul %286, %11, %cst_72 {dimension_numbers = #tpu.dot_dimension_numbers<[1], [0], [0], [1], [0, 0, 1, 1], [], []>} : vector<8x32xf32>, vector<32x128xf32>, vector<8x128xf32> -> vector<8x128xf32>
    %310 = arith.addf %308, %309 : vector<8x128xf32>
    %311 = arith.mulf %310, %8 : vector<8x128xf32>
    %312 = math.tanh %311 : vector<8x128xf32>
    %cst_73 = arith.constant 5.000000e-01 : f32
    %313 = vector.broadcast %cst_73 : f32 to vector<8x128xf32>
    %314 = arith.mulf %313, %312 : vector<8x128xf32>
    %cst_74 = arith.constant 5.000000e-01 : f32
    %315 = vector.broadcast %cst_74 : f32 to vector<8x128xf32>
    %316 = arith.addf %314, %315 : vector<8x128xf32>
    %317 = arith.select %5, %312, %316 : vector<8x128xi1>, vector<8x128xf32>
    %318 = vector.extract_strided_slice %317 {offsets = [0, 0], sizes = [8, 32], strides = [1, 1]} : vector<8x128xf32> to vector<8x32xf32>
    %319 = vector.extract_strided_slice %317 {offsets = [0, 32], sizes = [8, 32], strides = [1, 1]} : vector<8x128xf32> to vector<8x32xf32>
    %320 = vector.extract_strided_slice %317 {offsets = [0, 64], sizes = [8, 32], strides = [1, 1]} : vector<8x128xf32> to vector<8x32xf32>
    %321 = vector.extract_strided_slice %317 {offsets = [0, 96], sizes = [8, 32], strides = [1, 1]} : vector<8x128xf32> to vector<8x32xf32>
    %322 = arith.mulf %319, %284 : vector<8x32xf32>
    %323 = arith.mulf %318, %320 : vector<8x32xf32>
    %324 = arith.addf %322, %323 : vector<8x32xf32>
    %325 = math.tanh %324 : vector<8x32xf32>
    %326 = arith.mulf %321, %325 : vector<8x32xf32>
    %cst_75 = arith.constant dense<0.000000e+00> : vector<8x128xf32>
    %327 = tpu.matmul %326, %15, %cst_75 {dimension_numbers = #tpu.dot_dimension_numbers<[1], [0], [0], [1], [0, 0, 1, 1], [], []>} : vector<8x32xf32>, vector<32x128xf32>, vector<8x128xf32> -> vector<8x128xf32>
    %cst_76 = arith.constant dense<0.000000e+00> : vector<8x128xf32>
    %328 = tpu.matmul %307, %13, %cst_76 {dimension_numbers = #tpu.dot_dimension_numbers<[1], [0], [0], [1], [0, 0, 1, 1], [], []>} : vector<8x32xf32>, vector<32x128xf32>, vector<8x128xf32> -> vector<8x128xf32>
    %329 = arith.addf %327, %328 : vector<8x128xf32>
    %330 = vector.broadcast %19 : vector<1x128xf32> to vector<8x128xf32>
    %331 = arith.addf %329, %330 : vector<8x128xf32>
    %332 = arith.mulf %331, %8 : vector<8x128xf32>
    %333 = math.tanh %332 : vector<8x128xf32>
    %cst_77 = arith.constant 5.000000e-01 : f32
    %334 = vector.broadcast %cst_77 : f32 to vector<8x128xf32>
    %335 = arith.mulf %334, %333 : vector<8x128xf32>
    %cst_78 = arith.constant 5.000000e-01 : f32
    %336 = vector.broadcast %cst_78 : f32 to vector<8x128xf32>
    %337 = arith.addf %335, %336 : vector<8x128xf32>
    %338 = arith.select %5, %333, %337 : vector<8x128xi1>, vector<8x128xf32>
    %339 = vector.extract_strided_slice %338 {offsets = [0, 0], sizes = [8, 32], strides = [1, 1]} : vector<8x128xf32> to vector<8x32xf32>
    %340 = vector.extract_strided_slice %338 {offsets = [0, 32], sizes = [8, 32], strides = [1, 1]} : vector<8x128xf32> to vector<8x32xf32>
    %341 = vector.extract_strided_slice %338 {offsets = [0, 64], sizes = [8, 32], strides = [1, 1]} : vector<8x128xf32> to vector<8x32xf32>
    %342 = vector.extract_strided_slice %338 {offsets = [0, 96], sizes = [8, 32], strides = [1, 1]} : vector<8x128xf32> to vector<8x32xf32>
    %343 = arith.mulf %340, %305 : vector<8x32xf32>
    %344 = arith.mulf %339, %341 : vector<8x32xf32>
    %345 = arith.addf %343, %344 : vector<8x32xf32>
    %346 = math.tanh %345 : vector<8x32xf32>
    %347 = arith.mulf %342, %346 : vector<8x32xf32>
    %c0_79 = arith.constant 0 : index
    %c0_80 = arith.constant 0 : index
    %c0_81 = arith.constant 0 : index
    %348 = vector.load %arg5[%c0_79, %c0_80, %c0_81] : memref<2x8x32xf32, #tpu.memory_space<vmem>>, vector<1x8x32xf32>
    %349 = vector.shape_cast %348 : vector<1x8x32xf32> to vector<8x32xf32>
    %350 = vector.shape_cast %326 : vector<8x32xf32> to vector<1x8x32xf32>
    tpu.vector_store %arg5[%c0_79, %c0_80, %c0_81], %350 {strides = array<i32>} : memref<2x8x32xf32, #tpu.memory_space<vmem>>, vector<1x8x32xf32>,
    %c0_82 = arith.constant 0 : index
    %c0_83 = arith.constant 0 : index
    %c0_84 = arith.constant 0 : index
    %351 = vector.load %arg6[%c0_82, %c0_83, %c0_84] : memref<2x8x32xf32, #tpu.memory_space<vmem>>, vector<1x8x32xf32>
    %352 = vector.shape_cast %351 : vector<1x8x32xf32> to vector<8x32xf32>
    %353 = vector.shape_cast %324 : vector<8x32xf32> to vector<1x8x32xf32>
    tpu.vector_store %arg6[%c0_82, %c0_83, %c0_84], %353 {strides = array<i32>} : memref<2x8x32xf32, #tpu.memory_space<vmem>>, vector<1x8x32xf32>,
    %c1_85 = arith.constant 1 : index
    %c0_86 = arith.constant 0 : index
    %c0_87 = arith.constant 0 : index
    %354 = vector.load %arg5[%c1_85, %c0_86, %c0_87] : memref<2x8x32xf32, #tpu.memory_space<vmem>>, vector<1x8x32xf32>
    %355 = vector.shape_cast %354 : vector<1x8x32xf32> to vector<8x32xf32>
    %356 = vector.shape_cast %347 : vector<8x32xf32> to vector<1x8x32xf32>
    tpu.vector_store %arg5[%c1_85, %c0_86, %c0_87], %356 {strides = array<i32>} : memref<2x8x32xf32, #tpu.memory_space<vmem>>, vector<1x8x32xf32>,
    %c1_88 = arith.constant 1 : index
    %c0_89 = arith.constant 0 : index
    %c0_90 = arith.constant 0 : index
    %357 = vector.load %arg6[%c1_88, %c0_89, %c0_90] : memref<2x8x32xf32, #tpu.memory_space<vmem>>, vector<1x8x32xf32>
    %358 = vector.shape_cast %357 : vector<1x8x32xf32> to vector<8x32xf32>
    %359 = vector.shape_cast %345 : vector<8x32xf32> to vector<1x8x32xf32>
    tpu.vector_store %arg6[%c1_88, %c0_89, %c0_90], %359 {strides = array<i32>} : memref<2x8x32xf32, #tpu.memory_space<vmem>>, vector<1x8x32xf32>,
    return
  }
}

</mosaic_0001>

<llo_original>
// kernel: tpu_custom_call.1
$region0: #{tpu_custom_call.1}
  #allocation0 [shape = 'u32[]', space=smem, size = 0x4, offset = 0x4, fixed_abs, tag = 'smem constant byte address 0x4 - core index']
  #allocation1 [shape = 'u32[72,128]{1,0:T(1,128)}', space=vmem, size = 0x9000, scoped, tag = 'internal scratch']
  %s0 = inlined_call_operand.vmem [shape: f32[64,32], index: 0, kind: input, shape index: {}]
  %s1 = inlined_call_operand.vmem [shape: f32[32,128], index: 1, kind: input, shape index: {}]
  %s2 = inlined_call_operand.vmem [shape: f32[2,32,128], index: 2, kind: input, shape index: {}]
  %s3 = inlined_call_operand.hbm [shape: f32[1,32,128], index: 3, kind: input, shape index: {}]
  %s4 = inlined_call_operand.vmem [shape: f32[2,1,128], index: 4, kind: input, shape index: {}]
  %s5 = inlined_call_operand.hbm [shape: f32[2,8,32], index: 5, kind: output, shape index: {0}]
  %s6 = inlined_call_operand.hbm [shape: f32[2,8,32], index: 6, kind: output, shape index: {1}]
  %7 = xla_tuple %s5, %s6
  %s8 = sld [smem:[#allocation0]]
  $region42: #{tpu_custom_call.1} parent=0
    _
  %s10 = ssub.s32 1, %s8
  %s11 = scalar_select 0, %s10, %s8
  $region1: #{tpu_custom_call.1} parent=0
    #allocation2 [shape = 'u8[16384]{0}', space=vmem, size = 0x4000, scoped, tag = 'input window, operand 3, single buffered']
    #allocation3 [shape = 's32[1]{0}', space=sflag, size = 0x4, scoped, tag = 'scoped memory for tpu_custom_call.1']
    #allocation4 [shape = 's32[1]{0}', space=sflag, size = 0x4, scoped, tag = 'scoped memory for tpu_custom_call.1']
    #allocation5 [shape = 'u8[8192]{0}', space=vmem, size = 0x2000, scoped, tag = 'output window, operand 0, single buffered']
    #allocation6 [shape = 'u8[8192]{0}', space=vmem, size = 0x2000, scoped, tag = 'output window, operand 1, single buffered']
    #allocation7 [shape = 's32[1]{0}', space=sflag, size = 0x4, scoped, tag = 'scoped memory for tpu_custom_call.1']
    %12 = vsyncpa [#allocation3], 0
    %13 = vsyncpa [#allocation4], 0
    %14 = vsyncpa [#allocation7], 0
    // Predicated region
    $region2: #{tpu_custom_call.1} parent=1 // pred_check
      _
    $region3: #{tpu_custom_call.1} parent=1 // pred_check_branch
      %16 = sbr.rel (0) target = $region5
    $region4: #{tpu_custom_call.1} parent=1 // pred_region
      _
    $region5: #{tpu_custom_call.1} parent=1 // pred_fallthru
      _
    // Predicated region
    $region6: #{tpu_custom_call.1} parent=1 // pred_check
      _
    $region7: #{tpu_custom_call.1} parent=1 // pred_check_branch
      %18 = sbr.rel (0) target = $region9
    $region8: #{tpu_custom_call.1} parent=1 // pred_region
      _
    $region9: #{tpu_custom_call.1} parent=1 // pred_fallthru
      _
    // Predicated region
    $region10: #{tpu_custom_call.1} parent=1 // pred_check
      _
    $region11: #{tpu_custom_call.1} parent=1 // pred_check_branch
      %20 = sbr.rel (0) target = $region13
    $region12: #{tpu_custom_call.1} parent=1 // pred_region
      _
    $region13: #{tpu_custom_call.1} parent=1 // pred_fallthru
      _
    // Predicated region
    $region14: #{tpu_custom_call.1} parent=1 // pred_check
      _
    $region15: #{tpu_custom_call.1} parent=1 // pred_check_branch
      %22 = sbr.rel (0) target = $region17
    $region16: #{tpu_custom_call.1} parent=1 // pred_region
      %24 = vsyncadd [#allocation3], 0
      %s25 = sshll.u32 %s3, 4
      %s26 = int_to_ptr.hbm [resolvable:$true] %s25
      %s27 = sshll.u32 [#allocation2], 4
      %s28 = int_to_ptr.vmem [resolvable:$true] %s27
      %33 = dma.hbm_to_vmem [thread:$0]  %s26, 512, %s28, [#allocation3], 128, 128, 8
    $region17: #{tpu_custom_call.1} parent=1 // pred_fallthru
      _
    // Predicated region
    $region18: #{tpu_custom_call.1} parent=1 // pred_check
      _
    $region19: #{tpu_custom_call.1} parent=1 // pred_check_branch
      %35 = sbr.rel (0) target = $region21
    $region20: #{tpu_custom_call.1} parent=1 // pred_region
      _
    $region21: #{tpu_custom_call.1} parent=1 // pred_fallthru
      _
    // Predicated region
    $region22: #{tpu_custom_call.1} parent=1 // pred_check
      _
    $region23: #{tpu_custom_call.1} parent=1 // pred_check_branch
      %37 = sbr.rel (0) target = $region25
    $region24: #{tpu_custom_call.1} parent=1 // pred_region
      %39 = dma.done [#allocation3], 512
    $region25: #{tpu_custom_call.1} parent=1 // pred_fallthru
      _
    %v40 = vlaneseq
    %v41 = vand.u32 %v40, 127
    %vm42 = vcmp.ge.s32.totalorder %v41, 64
    %vm43 = vcmp.lt.s32.totalorder %v41, 96
    %vm44 = vmand %vm42, %vm43
    %v45 = vsel %vm44, 1.0, 0.5
    %v46 = vld [vmem:[%s1] sm:$0xff]
    %v47 = vld [vmem:[%s1 + $0x8] sm:$0xff]
    %v48 = vld [vmem:[%s1 + $0x10] sm:$0xff]
    %v49 = vld [vmem:[%s1 + $0x18] sm:$0xff]
    %v50 = vld [vmem:[%s2] sm:$0xff]
    %v51 = vld [vmem:[%s2 + $0x8] sm:$0xff]
    %v52 = vld [vmem:[%s2 + $0x10] sm:$0xff]
    %v53 = vld [vmem:[%s2 + $0x18] sm:$0xff]
    %s54 = scalar_lea.vmem %s2, 32
    %v55 = vld [vmem:[%s54] sm:$0xff]
    %v56 = vld [vmem:[%s54 + $0x8] sm:$0xff]
    %v57 = vld [vmem:[%s54 + $0x10] sm:$0xff]
    %v58 = vld [vmem:[%s54 + $0x18] sm:$0xff]
    %v59 = vld [vmem:[#allocation2] sm:$0xff]
    %v60 = vld [vmem:[#allocation2 + $0x8] sm:$0xff]
    %v61 = vld [vmem:[#allocation2 + $0x10] sm:$0xff]
    %v62 = vld [vmem:[#allocation2 + $0x18] sm:$0xff]
    %v63 = vld [vmem:[%s4] sm:$0x1]
    %s64 = scalar_lea.vmem %s4, 1
    %v65 = vld [vmem:[%s64] sm:$0x1]
    %v66 = vld [vmem:[%s0] sm:$0xff]
    %v67 = vld [vmem:[%s0 + $0x8] sm:$0xff]
    %v68 = vld [vmem:[%s0 + $0x10] sm:$0xff]
    %v69 = vld [vmem:[%s0 + $0x18] sm:$0xff]
    %v70 = vld [vmem:[%s0 + $0x20] sm:$0xff]
    %v71 = vld [vmem:[%s0 + $0x28] sm:$0xff]
    %v72 = vld [vmem:[%s0 + $0x30] sm:$0xff]
    %v73 = vld [vmem:[%s0 + $0x38] sm:$0xff]
    %v75 = vperm.slane %v63, 0
    %vm77 = vcmask 261120
    %v79 = vsel %vm77, %v66, 0
    %v82 = vsel %vm77, %v67, 0
    %v85 = vsel %vm77, %v68, 0
    %v88 = vsel %vm77, %v69, 0
    %v91 = vsel %vm77, %v70, 0
    %v94 = vsel %vm77, %v71, 0
    %v97 = vsel %vm77, %v72, 0
    %v100 = vsel %vm77, %v73, 0
    %102 = vmatpush.msra.mxu0 0.0
    %103 = vmatpush.msra.mxu0 0.0
    %104 = vmatpush.msra.mxu0 0.0
    %105 = vmatpush.msra.mxu0 0.0
    %106 = vmatpush.msra.mxu0 0.0
    %107 = vmatpush.msra.mxu0 0.0
    %108 = vmatpush.msra.mxu0 0.0
    %109 = vmatpush.msra.mxu0 0.0
    %110 = vmatpush.msra.mxu0 0.0
    %111 = vmatpush.msra.mxu0 0.0
    %112 = vmatpush.msra.mxu0 0.0
    %113 = vmatpush.msra.mxu0 0.0
    %114 = vmatpush.msra.mxu0 %v49
    %115 = vmatpush.msra.mxu0 %v48
    %116 = vmatpush.msra.mxu0 %v47
    %117 = vmatpush.msra.mxu0 %v46
    %118 = vmatmul.f32.gmra.mxu0 %v79
    %v119 = vpop.f32.mrf.mxu0
    %v120 = vadd.f32 %v75, %v119
    %121 = vmatmul.f32.gmra.mxu0 %v82
    %v122 = vpop.f32.mrf.mxu0
    %v123 = vadd.f32 %v75, %v122
    %124 = vmatmul.f32.gmra.mxu0 %v85
    %v125 = vpop.f32.mrf.mxu0
    %v126 = vadd.f32 %v75, %v125
    %127 = vmatmul.f32.gmra.mxu0 %v88
    %v128 = vpop.f32.mrf.mxu0
    %v129 = vadd.f32 %v75, %v128
    %130 = vmatmul.f32.gmra.mxu0 %v91
    %v131 = vpop.f32.mrf.mxu0
    %v132 = vadd.f32 %v75, %v131
    %133 = vmatmul.f32.gmra.mxu0 %v94
    %v134 = vpop.f32.mrf.mxu0
    %v135 = vadd.f32 %v75, %v134
    %136 = vmatmul.f32.gmra.mxu0 %v97
    %v137 = vpop.f32.mrf.mxu0
    %v138 = vadd.f32 %v75, %v137
    %139 = vmatmul.f32.gmra.mxu0 %v100
    %v140 = vpop.f32.mrf.mxu0
    %v141 = vadd.f32 %v75, %v140
    %142 = vdwg.mxu0
    %v144 = vsel %vm77, 0.0, 0
    %146 = vmatpush.msra.mxu0 0.0
    %147 = vmatpush.msra.mxu0 0.0
    %148 = vmatpush.msra.mxu0 0.0
    %149 = vmatpush.msra.mxu0 0.0
    %150 = vmatpush.msra.mxu0 0.0
    %151 = vmatpush.msra.mxu0 0.0
    %152 = vmatpush.msra.mxu0 0.0
    %153 = vmatpush.msra.mxu0 0.0
    %154 = vmatpush.msra.mxu0 0.0
    %155 = vmatpush.msra.mxu0 0.0
    %156 = vmatpush.msra.mxu0 0.0
    %157 = vmatpush.msra.mxu0 0.0
    %158 = vmatpush.msra.mxu0 %v53
    %159 = vmatpush.msra.mxu0 %v52
    %160 = vmatpush.msra.mxu0 %v51
    %161 = vmatpush.msra.mxu0 %v50
    %162 = vmatmul.f32.gmra.mxu0 %v144
    %v163 = vpop.f32.mrf.mxu0
    %v164 = vadd.f32 0.0, %v163
    %165 = vdwg.mxu0
    %v166 = vadd.f32 %v120, %v164
    %v167 = vmul.f32 %v166, %v45
    %v168 = vtanh.pop %v167
    %v169 = vmul.f32 %v168, 0.5
    %v170 = vadd.f32 %v169, 0.5
    %v171 = vsel %vm44, %v168, %v170
    %v172 = vmul.f32 %v171, 0.0
    %174 = vrot.lane.b32.xlu0 %v171, 64
    %v175 = vpop.permute.xlu0 %174
    %v177 = vmul.f32 %v171, %v175
    %179 = vrot.lane.b32.xlu0 %v177, 32
    %v180 = vpop.permute.xlu0 %179
    %v182 = vadd.f32 %v172, %v180
    %v183 = vtanh.pop %v182
    %185 = vrot.lane.b32.xlu0 %v183, 64
    %v186 = vpop.permute.xlu0 %185
    %v188 = vmul.f32 %v171, %v186
    %189 = vmatpush.msra.mxu0 0.0
    %190 = vmatpush.msra.mxu0 0.0
    %191 = vmatpush.msra.mxu0 0.0
    %192 = vmatpush.msra.mxu0 0.0
    %193 = vmatpush.msra.mxu0 0.0
    %194 = vmatpush.msra.mxu0 0.0
    %195 = vmatpush.msra.mxu0 0.0
    %196 = vmatpush.msra.mxu0 0.0
    %197 = vmatpush.msra.mxu0 0.0
    %198 = vmatpush.msra.mxu0 0.0
    %199 = vmatpush.msra.mxu0 0.0
    %200 = vmatpush.msra.mxu0 0.0
    %201 = vmatpush.msra.mxu0 %v58
    %202 = vmatpush.msra.mxu0 %v57
    %203 = vmatpush.msra.mxu0 %v56
    %204 = vmatpush.msra.mxu0 %v55
    %205 = vmatmul.f32.gmra.mxu0 %v144
    %v206 = vpop.f32.mrf.mxu0
    %v207 = vadd.f32 0.0, %v206
    %208 = vdwg.mxu0
    %210 = vrot.lane.b32.xlu0 %v188, 32
    %v211 = vpop.permute.xlu0 %210
    %v212 = vsel %vm77, %v211, 0
    %214 = vmatpush.msra.mxu0 0.0
    %215 = vmatpush.msra.mxu0 0.0
    %216 = vmatpush.msra.mxu0 0.0
    %217 = vmatpush.msra.mxu0 0.0
    %218 = vmatpush.msra.mxu0 0.0
    %219 = vmatpush.msra.mxu0 0.0
    %220 = vmatpush.msra.mxu0 0.0
    %221 = vmatpush.msra.mxu0 0.0
    %222 = vmatpush.msra.mxu0 0.0
    %223 = vmatpush.msra.mxu0 0.0
    %224 = vmatpush.msra.mxu0 0.0
    %225 = vmatpush.msra.mxu0 0.0
    %226 = vmatpush.msra.mxu0 %v62
    %227 = vmatpush.msra.mxu0 %v61
    %228 = vmatpush.msra.mxu0 %v60
    %229 = vmatpush.msra.mxu0 %v59
    %230 = vmatmul.f32.gmra.mxu0 %v212
    %v231 = vpop.f32.mrf.mxu0
    %v232 = vadd.f32 %v207, %v231
    %233 = vdwg.mxu0
    %v235 = vperm.slane %v65, 0
    %v237 = vadd.f32 %v232, %v235
    %v238 = vmul.f32 %v237, %v45
    %v239 = vtanh.pop %v238
    %v240 = vmul.f32 %v239, 0.5
    %v241 = vadd.f32 %v240, 0.5
    %v242 = vsel %vm44, %v239, %v241
    %v243 = vmul.f32 %v242, 0.0
    %245 = vrot.lane.b32.xlu0 %v242, 64
    %v246 = vpop.permute.xlu0 %245
    %v248 = vmul.f32 %v242, %v246
    %250 = vrot.lane.b32.xlu0 %v248, 32
    %v251 = vpop.permute.xlu0 %250
    %v253 = vadd.f32 %v243, %v251
    %v254 = vtanh.pop %v253
    %256 = vrot.lane.b32.xlu0 %v254, 64
    %v257 = vpop.permute.xlu0 %256
    %v259 = vmul.f32 %v242, %v257
    %260 = vmatpush.msra.mxu0 0.0
    %261 = vmatpush.msra.mxu0 0.0
    %262 = vmatpush.msra.mxu0 0.0
    %263 = vmatpush.msra.mxu0 0.0
    %264 = vmatpush.msra.mxu0 0.0
    %265 = vmatpush.msra.mxu0 0.0
    %266 = vmatpush.msra.mxu0 0.0
    %267 = vmatpush.msra.mxu0 0.0
    %268 = vmatpush.msra.mxu0 0.0
    %269 = vmatpush.msra.mxu0 0.0
    %270 = vmatpush.msra.mxu0 0.0
    %271 = vmatpush.msra.mxu0 0.0
    %272 = vmatpush.msra.mxu0 %v53
    %273 = vmatpush.msra.mxu0 %v52
    %274 = vmatpush.msra.mxu0 %v51
    %275 = vmatpush.msra.mxu0 %v50
    %276 = vmatmul.f32.gmra.mxu0 %v212
    %v277 = vpop.f32.mrf.mxu0
    %v278 = vadd.f32 0.0, %v277
    %279 = vdwg.mxu0
    %v280 = vadd.f32 %v123, %v278
    %v281 = vmul.f32 %v280, %v45
    %v282 = vtanh.pop %v281
    %v283 = vmul.f32 %v282, 0.5
    %v284 = vadd.f32 %v283, 0.5
    %v285 = vsel %vm44, %v282, %v284
    %v286 = vmul.f32 %v285, %v182
    %288 = vrot.lane.b32.xlu0 %v285, 64
    %v289 = vpop.permute.xlu0 %288
    %v291 = vmul.f32 %v285, %v289
    %293 = vrot.lane.b32.xlu0 %v291, 32
    %v294 = vpop.permute.xlu0 %293
    %v296 = vadd.f32 %v286, %v294
    %v297 = vtanh.pop %v296
    %299 = vrot.lane.b32.xlu0 %v297, 64
    %v300 = vpop.permute.xlu0 %299
    %v302 = vmul.f32 %v285, %v300
    %304 = vrot.lane.b32.xlu0 %v259, 32
    %v305 = vpop.permute.xlu0 %304
    %v306 = vsel %vm77, %v305, 0
    %308 = vmatpush.msra.mxu0 0.0
    %309 = vmatpush.msra.mxu0 0.0
    %310 = vmatpush.msra.mxu0 0.0
    %311 = vmatpush.msra.mxu0 0.0
    %312 = vmatpush.msra.mxu0 0.0
    %313 = vmatpush.msra.mxu0 0.0
    %314 = vmatpush.msra.mxu0 0.0
    %315 = vmatpush.msra.mxu0 0.0
    %316 = vmatpush.msra.mxu0 0.0
    %317 = vmatpush.msra.mxu0 0.0
    %318 = vmatpush.msra.mxu0 0.0
    %319 = vmatpush.msra.mxu0 0.0
    %320 = vmatpush.msra.mxu0 %v58
    %321 = vmatpush.msra.mxu0 %v57
    %322 = vmatpush.msra.mxu0 %v56
    %323 = vmatpush.msra.mxu0 %v55
    %324 = vmatmul.f32.gmra.mxu0 %v306
    %v325 = vpop.f32.mrf.mxu0
    %v326 = vadd.f32 0.0, %v325
    %327 = vdwg.mxu0
    %329 = vrot.lane.b32.xlu0 %v302, 32
    %v330 = vpop.permute.xlu0 %329
    %v331 = vsel %vm77, %v330, 0
    %333 = vmatpush.msra.mxu0 0.0
    %334 = vmatpush.msra.mxu0 0.0
    %335 = vmatpush.msra.mxu0 0.0
    %336 = vmatpush.msra.mxu0 0.0
    %337 = vmatpush.msra.mxu0 0.0
    %338 = vmatpush.msra.mxu0 0.0
    %339 = vmatpush.msra.mxu0 0.0
    %340 = vmatpush.msra.mxu0 0.0
    %341 = vmatpush.msra.mxu0 0.0
    %342 = vmatpush.msra.mxu0 0.0
    %343 = vmatpush.msra.mxu0 0.0
    %344 = vmatpush.msra.mxu0 0.0
    %345 = vmatpush.msra.mxu0 %v62
    %346 = vmatpush.msra.mxu0 %v61
    %347 = vmatpush.msra.mxu0 %v60
    %348 = vmatpush.msra.mxu0 %v59
    %349 = vmatmul.f32.gmra.mxu0 %v331
    %v350 = vpop.f32.mrf.mxu0
    %v351 = vadd.f32 %v326, %v350
    %352 = vdwg.mxu0
    %v353 = vadd.f32 %v351, %v235
    %v354 = vmul.f32 %v353, %v45
    %v355 = vtanh.pop %v354
    %v356 = vmul.f32 %v355, 0.5
    %v357 = vadd.f32 %v356, 0.5
    %v358 = vsel %vm44, %v355, %v357
    %v359 = vmul.f32 %v358, %v253
    %361 = vrot.lane.b32.xlu0 %v358, 64
    %v362 = vpop.permute.xlu0 %361
    %v364 = vmul.f32 %v358, %v362
    %366 = vrot.lane.b32.xlu0 %v364, 32
    %v367 = vpop.permute.xlu0 %366
    %v369 = vadd.f32 %v359, %v367
    %v370 = vtanh.pop %v369
    %372 = vrot.lane.b32.xlu0 %v370, 64
    %v373 = vpop.permute.xlu0 %372
    %v375 = vmul.f32 %v358, %v373
    %376 = vmatpush.msra.mxu0 0.0
    %377 = vmatpush.msra.mxu0 0.0
    %378 = vmatpush.msra.mxu0 0.0
    %379 = vmatpush.msra.mxu0 0.0
    %380 = vmatpush.msra.mxu0 0.0
    %381 = vmatpush.msra.mxu0 0.0
    %382 = vmatpush.msra.mxu0 0.0
    %383 = vmatpush.msra.mxu0 0.0
    %384 = vmatpush.msra.mxu0 0.0
    %385 = vmatpush.msra.mxu0 0.0
    %386 = vmatpush.msra.mxu0 0.0
    %387 = vmatpush.msra.mxu0 0.0
    %388 = vmatpush.msra.mxu0 %v53
    %389 = vmatpush.msra.mxu0 %v52
    %390 = vmatpush.msra.mxu0 %v51
    %391 = vmatpush.msra.mxu0 %v50
    %392 = vmatmul.f32.gmra.mxu0 %v331
    %v393 = vpop.f32.mrf.mxu0
    %v394 = vadd.f32 0.0, %v393
    %395 = vdwg.mxu0
    %v396 = vadd.f32 %v126, %v394
    %v397 = vmul.f32 %v396, %v45
    %v398 = vtanh.pop %v397
    %v399 = vmul.f32 %v398, 0.5
    %v400 = vadd.f32 %v399, 0.5
    %v401 = vsel %vm44, %v398, %v400
    %v402 = vmul.f32 %v401, %v296
    %404 = vrot.lane.b32.xlu0 %v401, 64
    %v405 = vpop.permute.xlu0 %404
    %v407 = vmul.f32 %v401, %v405
    %409 = vrot.lane.b32.xlu0 %v407, 32
    %v410 = vpop.permute.xlu0 %409
    %v412 = vadd.f32 %v402, %v410
    %v413 = vtanh.pop %v412
    %415 = vrot.lane.b32.xlu0 %v413, 64
    %v416 = vpop.permute.xlu0 %415
    %v418 = vmul.f32 %v401, %v416
    %420 = vrot.lane.b32.xlu0 %v375, 32
    %v421 = vpop.permute.xlu0 %420
    %v422 = vsel %vm77, %v421, 0
    %424 = vmatpush.msra.mxu0 0.0
    %425 = vmatpush.msra.mxu0 0.0
    %426 = vmatpush.msra.mxu0 0.0
    %427 = vmatpush.msra.mxu0 0.0
    %428 = vmatpush.msra.mxu0 0.0
    %429 = vmatpush.msra.mxu0 0.0
    %430 = vmatpush.msra.mxu0 0.0
    %431 = vmatpush.msra.mxu0 0.0
    %432 = vmatpush.msra.mxu0 0.0
    %433 = vmatpush.msra.mxu0 0.0
    %434 = vmatpush.msra.mxu0 0.0
    %435 = vmatpush.msra.mxu0 0.0
    %436 = vmatpush.msra.mxu0 %v58
    %437 = vmatpush.msra.mxu0 %v57
    %438 = vmatpush.msra.mxu0 %v56
    %439 = vmatpush.msra.mxu0 %v55
    %440 = vmatmul.f32.gmra.mxu0 %v422
    %v441 = vpop.f32.mrf.mxu0
    %v442 = vadd.f32 0.0, %v441
    %443 = vdwg.mxu0
    %445 = vrot.lane.b32.xlu0 %v418, 32
    %v446 = vpop.permute.xlu0 %445
    %v447 = vsel %vm77, %v446, 0
    %449 = vmatpush.msra.mxu0 0.0
    %450 = vmatpush.msra.mxu0 0.0
    %451 = vmatpush.msra.mxu0 0.0
    %452 = vmatpush.msra.mxu0 0.0
    %453 = vmatpush.msra.mxu0 0.0
    %454 = vmatpush.msra.mxu0 0.0
    %455 = vmatpush.msra.mxu0 0.0
    %456 = vmatpush.msra.mxu0 0.0
    %457 = vmatpush.msra.mxu0 0.0
    %458 = vmatpush.msra.mxu0 0.0
    %459 = vmatpush.msra.mxu0 0.0
    %460 = vmatpush.msra.mxu0 0.0
    %461 = vmatpush.msra.mxu0 %v62
    %462 = vmatpush.msra.mxu0 %v61
    %463 = vmatpush.msra.mxu0 %v60
    %464 = vmatpush.msra.mxu0 %v59
    %465 = vmatmul.f32.gmra.mxu0 %v447
    %v466 = vpop.f32.mrf.mxu0
    %v467 = vadd.f32 %v442, %v466
    %468 = vdwg.mxu0
    %v469 = vadd.f32 %v467, %v235
    %v470 = vmul.f32 %v469, %v45
    %v471 = vtanh.pop %v470
    %v472 = vmul.f32 %v471, 0.5
    %v473 = vadd.f32 %v472, 0.5
    %v474 = vsel %vm44, %v471, %v473
    %v475 = vmul.f32 %v474, %v369
    %477 = vrot.lane.b32.xlu0 %v474, 64
    %v478 = vpop.permute.xlu0 %477
    %v480 = vmul.f32 %v474, %v478
    %482 = vrot.lane.b32.xlu0 %v480, 32
    %v483 = vpop.permute.xlu0 %482
    %v485 = vadd.f32 %v475, %v483
    %v486 = vtanh.pop %v485
    %488 = vrot.lane.b32.xlu0 %v486, 64
    %v489 = vpop.permute.xlu0 %488
    %v491 = vmul.f32 %v474, %v489
    %492 = vmatpush.msra.mxu0 0.0
    %493 = vmatpush.msra.mxu0 0.0
    %494 = vmatpush.msra.mxu0 0.0
    %495 = vmatpush.msra.mxu0 0.0
    %496 = vmatpush.msra.mxu0 0.0
    %497 = vmatpush.msra.mxu0 0.0
    %498 = vmatpush.msra.mxu0 0.0
    %499 = vmatpush.msra.mxu0 0.0
    %500 = vmatpush.msra.mxu0 0.0
    %501 = vmatpush.msra.mxu0 0.0
    %502 = vmatpush.msra.mxu0 0.0
    %503 = vmatpush.msra.mxu0 0.0
    %504 = vmatpush.msra.mxu0 %v53
    %505 = vmatpush.msra.mxu0 %v52
    %506 = vmatpush.msra.mxu0 %v51
    %507 = vmatpush.msra.mxu0 %v50
    %508 = vmatmul.f32.gmra.mxu0 %v447
    %v509 = vpop.f32.mrf.mxu0
    %v510 = vadd.f32 0.0, %v509
    %511 = vdwg.mxu0
    %v512 = vadd.f32 %v129, %v510
    %v513 = vmul.f32 %v512, %v45
    %v514 = vtanh.pop %v513
    %v515 = vmul.f32 %v514, 0.5
    %v516 = vadd.f32 %v515, 0.5
    %v517 = vsel %vm44, %v514, %v516
    %v518 = vmul.f32 %v517, %v412
    %520 = vrot.lane.b32.xlu0 %v517, 64
    %v521 = vpop.permute.xlu0 %520
    %v523 = vmul.f32 %v517, %v521
    %525 = vrot.lane.b32.xlu0 %v523, 32
    %v526 = vpop.permute.xlu0 %525
    %v528 = vadd.f32 %v518, %v526
    %v529 = vtanh.pop %v528
    %531 = vrot.lane.b32.xlu0 %v529, 64
    %v532 = vpop.permute.xlu0 %531
    %v534 = vmul.f32 %v517, %v532
    %536 = vrot.lane.b32.xlu0 %v491, 32
    %v537 = vpop.permute.xlu0 %536
    %v538 = vsel %vm77, %v537, 0
    %540 = vmatpush.msra.mxu0 0.0
    %541 = vmatpush.msra.mxu0 0.0
    %542 = vmatpush.msra.mxu0 0.0
    %543 = vmatpush.msra.mxu0 0.0
    %544 = vmatpush.msra.mxu0 0.0
    %545 = vmatpush.msra.mxu0 0.0
    %546 = vmatpush.msra.mxu0 0.0
    %547 = vmatpush.msra.mxu0 0.0
    %548 = vmatpush.msra.mxu0 0.0
    %549 = vmatpush.msra.mxu0 0.0
    %550 = vmatpush.msra.mxu0 0.0
    %551 = vmatpush.msra.mxu0 0.0
    %552 = vmatpush.msra.mxu0 %v58
    %553 = vmatpush.msra.mxu0 %v57
    %554 = vmatpush.msra.mxu0 %v56
    %555 = vmatpush.msra.mxu0 %v55
    %556 = vmatmul.f32.gmra.mxu0 %v538
    %v557 = vpop.f32.mrf.mxu0
    %v558 = vadd.f32 0.0, %v557
    %559 = vdwg.mxu0
    %561 = vrot.lane.b32.xlu0 %v534, 32
    %v562 = vpop.permute.xlu0 %561
    %v563 = vsel %vm77, %v562, 0
    %565 = vmatpush.msra.mxu0 0.0
    %566 = vmatpush.msra.mxu0 0.0
    %567 = vmatpush.msra.mxu0 0.0
    %568 = vmatpush.msra.mxu0 0.0
    %569 = vmatpush.msra.mxu0 0.0
    %570 = vmatpush.msra.mxu0 0.0
    %571 = vmatpush.msra.mxu0 0.0
    %572 = vmatpush.msra.mxu0 0.0
    %573 = vmatpush.msra.mxu0 0.0
    %574 = vmatpush.msra.mxu0 0.0
    %575 = vmatpush.msra.mxu0 0.0
    %576 = vmatpush.msra.mxu0 0.0
    %577 = vmatpush.msra.mxu0 %v62
    %578 = vmatpush.msra.mxu0 %v61
    %579 = vmatpush.msra.mxu0 %v60
    %580 = vmatpush.msra.mxu0 %v59
    %581 = vmatmul.f32.gmra.mxu0 %v563
    %v582 = vpop.f32.mrf.mxu0
    %v583 = vadd.f32 %v558, %v582
    %584 = vdwg.mxu0
    %v585 = vadd.f32 %v583, %v235
    %v586 = vmul.f32 %v585, %v45
    %v587 = vtanh.pop %v586
    %v588 = vmul.f32 %v587, 0.5
    %v589 = vadd.f32 %v588, 0.5
    %v590 = vsel %vm44, %v587, %v589
    %v591 = vmul.f32 %v590, %v485
    %593 = vrot.lane.b32.xlu0 %v590, 64
    %v594 = vpop.permute.xlu0 %593
    %v596 = vmul.f32 %v590, %v594
    %598 = vrot.lane.b32.xlu0 %v596, 32
    %v599 = vpop.permute.xlu0 %598
    %v601 = vadd.f32 %v591, %v599
    %v602 = vtanh.pop %v601
    %604 = vrot.lane.b32.xlu0 %v602, 64
    %v605 = vpop.permute.xlu0 %604
    %v607 = vmul.f32 %v590, %v605
    %608 = vmatpush.msra.mxu0 0.0
    %609 = vmatpush.msra.mxu0 0.0
    %610 = vmatpush.msra.mxu0 0.0
    %611 = vmatpush.msra.mxu0 0.0
    %612 = vmatpush.msra.mxu0 0.0
    %613 = vmatpush.msra.mxu0 0.0
    %614 = vmatpush.msra.mxu0 0.0
    %615 = vmatpush.msra.mxu0 0.0
    %616 = vmatpush.msra.mxu0 0.0
    %617 = vmatpush.msra.mxu0 0.0
    %618 = vmatpush.msra.mxu0 0.0
    %619 = vmatpush.msra.mxu0 0.0
    %620 = vmatpush.msra.mxu0 %v53
    %621 = vmatpush.msra.mxu0 %v52
    %622 = vmatpush.msra.mxu0 %v51
    %623 = vmatpush.msra.mxu0 %v50
    %624 = vmatmul.f32.gmra.mxu0 %v563
    %v625 = vpop.f32.mrf.mxu0
    %v626 = vadd.f32 0.0, %v625
    %627 = vdwg.mxu0
    %v628 = vadd.f32 %v132, %v626
    %v629 = vmul.f32 %v628, %v45
    %v630 = vtanh.pop %v629
    %v631 = vmul.f32 %v630, 0.5
    %v632 = vadd.f32 %v631, 0.5
    %v633 = vsel %vm44, %v630, %v632
    %v634 = vmul.f32 %v633, %v528
    %636 = vrot.lane.b32.xlu0 %v633, 64
    %v637 = vpop.permute.xlu0 %636
    %v639 = vmul.f32 %v633, %v637
    %641 = vrot.lane.b32.xlu0 %v639, 32
    %v642 = vpop.permute.xlu0 %641
    %v644 = vadd.f32 %v634, %v642
    %v645 = vtanh.pop %v644
    %647 = vrot.lane.b32.xlu0 %v645, 64
    %v648 = vpop.permute.xlu0 %647
    %v650 = vmul.f32 %v633, %v648
    %652 = vrot.lane.b32.xlu0 %v607, 32
    %v653 = vpop.permute.xlu0 %652
    %v654 = vsel %vm77, %v653, 0
    %656 = vmatpush.msra.mxu0 0.0
    %657 = vmatpush.msra.mxu0 0.0
    %658 = vmatpush.msra.mxu0 0.0
    %659 = vmatpush.msra.mxu0 0.0
    %660 = vmatpush.msra.mxu0 0.0
    %661 = vmatpush.msra.mxu0 0.0
    %662 = vmatpush.msra.mxu0 0.0
    %663 = vmatpush.msra.mxu0 0.0
    %664 = vmatpush.msra.mxu0 0.0
    %665 = vmatpush.msra.mxu0 0.0
    %666 = vmatpush.msra.mxu0 0.0
    %667 = vmatpush.msra.mxu0 0.0
    %668 = vmatpush.msra.mxu0 %v58
    %669 = vmatpush.msra.mxu0 %v57
    %670 = vmatpush.msra.mxu0 %v56
    %671 = vmatpush.msra.mxu0 %v55
    %672 = vmatmul.f32.gmra.mxu0 %v654
    %v673 = vpop.f32.mrf.mxu0
    %v674 = vadd.f32 0.0, %v673
    %675 = vdwg.mxu0
    %677 = vrot.lane.b32.xlu0 %v650, 32
    %v678 = vpop.permute.xlu0 %677
    %v679 = vsel %vm77, %v678, 0
    %681 = vmatpush.msra.mxu0 0.0
    %682 = vmatpush.msra.mxu0 0.0
    %683 = vmatpush.msra.mxu0 0.0
    %684 = vmatpush.msra.mxu0 0.0
    %685 = vmatpush.msra.mxu0 0.0
    %686 = vmatpush.msra.mxu0 0.0
    %687 = vmatpush.msra.mxu0 0.0
    %688 = vmatpush.msra.mxu0 0.0
    %689 = vmatpush.msra.mxu0 0.0
    %690 = vmatpush.msra.mxu0 0.0
    %691 = vmatpush.msra.mxu0 0.0
    %692 = vmatpush.msra.mxu0 0.0
    %693 = vmatpush.msra.mxu0 %v62
    %694 = vmatpush.msra.mxu0 %v61
    %695 = vmatpush.msra.mxu0 %v60
    %696 = vmatpush.msra.mxu0 %v59
    %697 = vmatmul.f32.gmra.mxu0 %v679
    %v698 = vpop.f32.mrf.mxu0
    %v699 = vadd.f32 %v674, %v698
    %700 = vdwg.mxu0
    %v701 = vadd.f32 %v699, %v235
    %v702 = vmul.f32 %v701, %v45
    %v703 = vtanh.pop %v702
    %v704 = vmul.f32 %v703, 0.5
    %v705 = vadd.f32 %v704, 0.5
    %v706 = vsel %vm44, %v703, %v705
    %v707 = vmul.f32 %v706, %v601
    %709 = vrot.lane.b32.xlu0 %v706, 64
    %v710 = vpop.permute.xlu0 %709
    %v712 = vmul.f32 %v706, %v710
    %714 = vrot.lane.b32.xlu0 %v712, 32
    %v715 = vpop.permute.xlu0 %714
    %v717 = vadd.f32 %v707, %v715
    %v718 = vtanh.pop %v717
    %720 = vrot.lane.b32.xlu0 %v718, 64
    %v721 = vpop.permute.xlu0 %720
    %v723 = vmul.f32 %v706, %v721
    %724 = vmatpush.msra.mxu0 0.0
    %725 = vmatpush.msra.mxu0 0.0
    %726 = vmatpush.msra.mxu0 0.0
    %727 = vmatpush.msra.mxu0 0.0
    %728 = vmatpush.msra.mxu0 0.0
    %729 = vmatpush.msra.mxu0 0.0
    %730 = vmatpush.msra.mxu0 0.0
    %731 = vmatpush.msra.mxu0 0.0
    %732 = vmatpush.msra.mxu0 0.0
    %733 = vmatpush.msra.mxu0 0.0
    %734 = vmatpush.msra.mxu0 0.0
    %735 = vmatpush.msra.mxu0 0.0
    %736 = vmatpush.msra.mxu0 %v53
    %737 = vmatpush.msra.mxu0 %v52
    %738 = vmatpush.msra.mxu0 %v51
    %739 = vmatpush.msra.mxu0 %v50
    %740 = vmatmul.f32.gmra.mxu0 %v679
    %v741 = vpop.f32.mrf.mxu0
    %v742 = vadd.f32 0.0, %v741
    %743 = vdwg.mxu0
    %v744 = vadd.f32 %v135, %v742
    %v745 = vmul.f32 %v744, %v45
    %v746 = vtanh.pop %v745
    %v747 = vmul.f32 %v746, 0.5
    %v748 = vadd.f32 %v747, 0.5
    %v749 = vsel %vm44, %v746, %v748
    %v750 = vmul.f32 %v749, %v644
    %752 = vrot.lane.b32.xlu0 %v749, 64
    %v753 = vpop.permute.xlu0 %752
    %v755 = vmul.f32 %v749, %v753
    %757 = vrot.lane.b32.xlu0 %v755, 32
    %v758 = vpop.permute.xlu0 %757
    %v760 = vadd.f32 %v750, %v758
    %v761 = vtanh.pop %v760
    %763 = vrot.lane.b32.xlu0 %v761, 64
    %v764 = vpop.permute.xlu0 %763
    %v766 = vmul.f32 %v749, %v764
    %768 = vrot.lane.b32.xlu0 %v723, 32
    %v769 = vpop.permute.xlu0 %768
    %v770 = vsel %vm77, %v769, 0
    %772 = vmatpush.msra.mxu0 0.0
    %773 = vmatpush.msra.mxu0 0.0
    %774 = vmatpush.msra.mxu0 0.0
    %775 = vmatpush.msra.mxu0 0.0
    %776 = vmatpush.msra.mxu0 0.0
    %777 = vmatpush.msra.mxu0 0.0
    %778 = vmatpush.msra.mxu0 0.0
    %779 = vmatpush.msra.mxu0 0.0
    %780 = vmatpush.msra.mxu0 0.0
    %781 = vmatpush.msra.mxu0 0.0
    %782 = vmatpush.msra.mxu0 0.0
    %783 = vmatpush.msra.mxu0 0.0
    %784 = vmatpush.msra.mxu0 %v58
    %785 = vmatpush.msra.mxu0 %v57
    %786 = vmatpush.msra.mxu0 %v56
    %787 = vmatpush.msra.mxu0 %v55
    %788 = vmatmul.f32.gmra.mxu0 %v770
    %v789 = vpop.f32.mrf.mxu0
    %v790 = vadd.f32 0.0, %v789
    %791 = vdwg.mxu0
    %793 = vrot.lane.b32.xlu0 %v766, 32
    %v794 = vpop.permute.xlu0 %793
    %v795 = vsel %vm77, %v794, 0
    %797 = vmatpush.msra.mxu0 0.0
    %798 = vmatpush.msra.mxu0 0.0
    %799 = vmatpush.msra.mxu0 0.0
    %800 = vmatpush.msra.mxu0 0.0
    %801 = vmatpush.msra.mxu0 0.0
    %802 = vmatpush.msra.mxu0 0.0
    %803 = vmatpush.msra.mxu0 0.0
    %804 = vmatpush.msra.mxu0 0.0
    %805 = vmatpush.msra.mxu0 0.0
    %806 = vmatpush.msra.mxu0 0.0
    %807 = vmatpush.msra.mxu0 0.0
    %808 = vmatpush.msra.mxu0 0.0
    %809 = vmatpush.msra.mxu0 %v62
    %810 = vmatpush.msra.mxu0 %v61
    %811 = vmatpush.msra.mxu0 %v60
    %812 = vmatpush.msra.mxu0 %v59
    %813 = vmatmul.f32.gmra.mxu0 %v795
    %v814 = vpop.f32.mrf.mxu0
    %v815 = vadd.f32 %v790, %v814
    %816 = vdwg.mxu0
    %v817 = vadd.f32 %v815, %v235
    %v818 = vmul.f32 %v817, %v45
    %v819 = vtanh.pop %v818
    %v820 = vmul.f32 %v819, 0.5
    %v821 = vadd.f32 %v820, 0.5
    %v822 = vsel %vm44, %v819, %v821
    %v823 = vmul.f32 %v822, %v717
    %825 = vrot.lane.b32.xlu0 %v822, 64
    %v826 = vpop.permute.xlu0 %825
    %v828 = vmul.f32 %v822, %v826
    %830 = vrot.lane.b32.xlu0 %v828, 32
    %v831 = vpop.permute.xlu0 %830
    %v833 = vadd.f32 %v823, %v831
    %v834 = vtanh.pop %v833
    %836 = vrot.lane.b32.xlu0 %v834, 64
    %v837 = vpop.permute.xlu0 %836
    %v839 = vmul.f32 %v822, %v837
    %840 = vmatpush.msra.mxu0 0.0
    %841 = vmatpush.msra.mxu0 0.0
    %842 = vmatpush.msra.mxu0 0.0
    %843 = vmatpush.msra.mxu0 0.0
    %844 = vmatpush.msra.mxu0 0.0
    %845 = vmatpush.msra.mxu0 0.0
    %846 = vmatpush.msra.mxu0 0.0
    %847 = vmatpush.msra.mxu0 0.0
    %848 = vmatpush.msra.mxu0 0.0
    %849 = vmatpush.msra.mxu0 0.0
    %850 = vmatpush.msra.mxu0 0.0
    %851 = vmatpush.msra.mxu0 0.0
    %852 = vmatpush.msra.mxu0 %v53
    %853 = vmatpush.msra.mxu0 %v52
    %854 = vmatpush.msra.mxu0 %v51
    %855 = vmatpush.msra.mxu0 %v50
    %856 = vmatmul.f32.gmra.mxu0 %v795
    %v857 = vpop.f32.mrf.mxu0
    %v858 = vadd.f32 0.0, %v857
    %859 = vdwg.mxu0
    %v860 = vadd.f32 %v138, %v858
    %v861 = vmul.f32 %v860, %v45
    %v862 = vtanh.pop %v861
    %v863 = vmul.f32 %v862, 0.5
    %v864 = vadd.f32 %v863, 0.5
    %v865 = vsel %vm44, %v862, %v864
    %v866 = vmul.f32 %v865, %v760
    %868 = vrot.lane.b32.xlu0 %v865, 64
    %v869 = vpop.permute.xlu0 %868
    %v871 = vmul.f32 %v865, %v869
    %873 = vrot.lane.b32.xlu0 %v871, 32
    %v874 = vpop.permute.xlu0 %873
    %v876 = vadd.f32 %v866, %v874
    %v877 = vtanh.pop %v876
    %879 = vrot.lane.b32.xlu0 %v877, 64
    %v880 = vpop.permute.xlu0 %879
    %v882 = vmul.f32 %v865, %v880
    %884 = vrot.lane.b32.xlu0 %v839, 32
    %v885 = vpop.permute.xlu0 %884
    %v886 = vsel %vm77, %v885, 0
    %888 = vmatpush.msra.mxu0 0.0
    %889 = vmatpush.msra.mxu0 0.0
    %890 = vmatpush.msra.mxu0 0.0
    %891 = vmatpush.msra.mxu0 0.0
    %892 = vmatpush.msra.mxu0 0.0
    %893 = vmatpush.msra.mxu0 0.0
    %894 = vmatpush.msra.mxu0 0.0
    %895 = vmatpush.msra.mxu0 0.0
    %896 = vmatpush.msra.mxu0 0.0
    %897 = vmatpush.msra.mxu0 0.0
    %898 = vmatpush.msra.mxu0 0.0
    %899 = vmatpush.msra.mxu0 0.0
    %900 = vmatpush.msra.mxu0 %v58
    %901 = vmatpush.msra.mxu0 %v57
    %902 = vmatpush.msra.mxu0 %v56
    %903 = vmatpush.msra.mxu0 %v55
    %904 = vmatmul.f32.gmra.mxu0 %v886
    %v905 = vpop.f32.mrf.mxu0
    %v906 = vadd.f32 0.0, %v905
    %907 = vdwg.mxu0
    %909 = vrot.lane.b32.xlu0 %v882, 32
    %v910 = vpop.permute.xlu0 %909
    %v911 = vsel %vm77, %v910, 0
    %913 = vmatpush.msra.mxu0 0.0
    %914 = vmatpush.msra.mxu0 0.0
    %915 = vmatpush.msra.mxu0 0.0
    %916 = vmatpush.msra.mxu0 0.0
    %917 = vmatpush.msra.mxu0 0.0
    %918 = vmatpush.msra.mxu0 0.0
    %919 = vmatpush.msra.mxu0 0.0
    %920 = vmatpush.msra.mxu0 0.0
    %921 = vmatpush.msra.mxu0 0.0
    %922 = vmatpush.msra.mxu0 0.0
    %923 = vmatpush.msra.mxu0 0.0
    %924 = vmatpush.msra.mxu0 0.0
    %925 = vmatpush.msra.mxu0 %v62
    %926 = vmatpush.msra.mxu0 %v61
    %927 = vmatpush.msra.mxu0 %v60
    %928 = vmatpush.msra.mxu0 %v59
    %929 = vmatmul.f32.gmra.mxu0 %v911
    %v930 = vpop.f32.mrf.mxu0
    %v931 = vadd.f32 %v906, %v930
    %932 = vdwg.mxu0
    %v933 = vadd.f32 %v931, %v235
    %v934 = vmul.f32 %v933, %v45
    %v935 = vtanh.pop %v934
    %v936 = vmul.f32 %v935, 0.5
    %v937 = vadd.f32 %v936, 0.5
    %v938 = vsel %vm44, %v935, %v937
    %v939 = vmul.f32 %v938, %v833
    %941 = vrot.lane.b32.xlu0 %v938, 64
    %v942 = vpop.permute.xlu0 %941
    %v944 = vmul.f32 %v938, %v942
    %946 = vrot.lane.b32.xlu0 %v944, 32
    %v947 = vpop.permute.xlu0 %946
    %v949 = vadd.f32 %v939, %v947
    %v950 = vtanh.pop %v949
    %952 = vrot.lane.b32.xlu0 %v950, 64
    %v953 = vpop.permute.xlu0 %952
    %v955 = vmul.f32 %v938, %v953
    %956 = vmatpush.msra.mxu0 0.0
    %957 = vmatpush.msra.mxu0 0.0
    %958 = vmatpush.msra.mxu0 0.0
    %959 = vmatpush.msra.mxu0 0.0
    %960 = vmatpush.msra.mxu0 0.0
    %961 = vmatpush.msra.mxu0 0.0
    %962 = vmatpush.msra.mxu0 0.0
    %963 = vmatpush.msra.mxu0 0.0
    %964 = vmatpush.msra.mxu0 0.0
    %965 = vmatpush.msra.mxu0 0.0
    %966 = vmatpush.msra.mxu0 0.0
    %967 = vmatpush.msra.mxu0 0.0
    %968 = vmatpush.msra.mxu0 %v53
    %969 = vmatpush.msra.mxu0 %v52
    %970 = vmatpush.msra.mxu0 %v51
    %971 = vmatpush.msra.mxu0 %v50
    %972 = vmatmul.f32.gmra.mxu0 %v911
    %v973 = vpop.f32.mrf.mxu0
    %v974 = vadd.f32 0.0, %v973
    %975 = vdwg.mxu0
    %v976 = vadd.f32 %v141, %v974
    %v977 = vmul.f32 %v976, %v45
    %v978 = vtanh.pop %v977
    %v979 = vmul.f32 %v978, 0.5
    %v980 = vadd.f32 %v979, 0.5
    %v981 = vsel %vm44, %v978, %v980
    %v982 = vmul.f32 %v981, %v876
    %984 = vrot.lane.b32.xlu0 %v981, 64
    %v985 = vpop.permute.xlu0 %984
    %v987 = vmul.f32 %v981, %v985
    %989 = vrot.lane.b32.xlu0 %v987, 32
    %v990 = vpop.permute.xlu0 %989
    %v992 = vadd.f32 %v982, %v990
    %v993 = vtanh.pop %v992
    %995 = vrot.lane.b32.xlu0 %v993, 64
    %v996 = vpop.permute.xlu0 %995
    %v998 = vmul.f32 %v981, %v996
    %1000 = vrot.lane.b32.xlu0 %v955, 32
    %v1001 = vpop.permute.xlu0 %1000
    %v1002 = vsel %vm77, %v1001, 0
    %1004 = vmatpush.msra.mxu0 0.0
    %1005 = vmatpush.msra.mxu0 0.0
    %1006 = vmatpush.msra.mxu0 0.0
    %1007 = vmatpush.msra.mxu0 0.0
    %1008 = vmatpush.msra.mxu0 0.0
    %1009 = vmatpush.msra.mxu0 0.0
    %1010 = vmatpush.msra.mxu0 0.0
    %1011 = vmatpush.msra.mxu0 0.0
    %1012 = vmatpush.msra.mxu0 0.0
    %1013 = vmatpush.msra.mxu0 0.0
    %1014 = vmatpush.msra.mxu0 0.0
    %1015 = vmatpush.msra.mxu0 0.0
    %1016 = vmatpush.msra.mxu0 %v58
    %1017 = vmatpush.msra.mxu0 %v57
    %1018 = vmatpush.msra.mxu0 %v56
    %1019 = vmatpush.msra.mxu0 %v55
    %1020 = vmatmul.f32.gmra.mxu0 %v1002
    %v1021 = vpop.f32.mrf.mxu0
    %v1022 = vadd.f32 0.0, %v1021
    %1023 = vdwg.mxu0
    %1025 = vrot.lane.b32.xlu0 %v998, 32
    %v1026 = vpop.permute.xlu0 %1025
    %v1027 = vsel %vm77, %v1026, 0
    %1029 = vmatpush.msra.mxu0 0.0
    %1030 = vmatpush.msra.mxu0 0.0
    %1031 = vmatpush.msra.mxu0 0.0
    %1032 = vmatpush.msra.mxu0 0.0
    %1033 = vmatpush.msra.mxu0 0.0
    %1034 = vmatpush.msra.mxu0 0.0
    %1035 = vmatpush.msra.mxu0 0.0
    %1036 = vmatpush.msra.mxu0 0.0
    %1037 = vmatpush.msra.mxu0 0.0
    %1038 = vmatpush.msra.mxu0 0.0
    %1039 = vmatpush.msra.mxu0 0.0
    %1040 = vmatpush.msra.mxu0 0.0
    %1041 = vmatpush.msra.mxu0 %v62
    %1042 = vmatpush.msra.mxu0 %v61
    %1043 = vmatpush.msra.mxu0 %v60
    %1044 = vmatpush.msra.mxu0 %v59
    %1045 = vmatmul.f32.gmra.mxu0 %v1027
    %v1046 = vpop.f32.mrf.mxu0
    %v1047 = vadd.f32 %v1022, %v1046
    %1048 = vdwg.mxu0
    %v1049 = vadd.f32 %v1047, %v235
    %v1050 = vmul.f32 %v1049, %v45
    %v1051 = vtanh.pop %v1050
    %v1052 = vmul.f32 %v1051, 0.5
    %v1053 = vadd.f32 %v1052, 0.5
    %v1054 = vsel %vm44, %v1051, %v1053
    %v1055 = vmul.f32 %v1054, %v949
    %1057 = vrot.lane.b32.xlu0 %v1054, 64
    %v1058 = vpop.permute.xlu0 %1057
    %v1060 = vmul.f32 %v1054, %v1058
    %1062 = vrot.lane.b32.xlu0 %v1060, 32
    %v1063 = vpop.permute.xlu0 %1062
    %v1065 = vadd.f32 %v1055, %v1063
    %v1066 = vtanh.pop %v1065
    %1068 = vrot.lane.b32.xlu0 %v1066, 64
    %v1069 = vpop.permute.xlu0 %1068
    %v1071 = vmul.f32 %v1054, %v1069
    %1073 = vst.msk [vmem:[#allocation5] sm:$0xff] %vm77, %v1026
    %1075 = vrot.lane.b32.xlu0 %v992, 96
    %v1076 = vpop.permute.xlu0 %1075
    %1078 = vst.msk [vmem:[#allocation6] sm:$0xff] %vm77, %v1076
    %1080 = vrot.lane.b32.xlu0 %v1071, 32
    %v1081 = vpop.permute.xlu0 %1080
    %s1083 = scalar_lea.vmem [#allocation5], 8
    %1084 = vst.msk [vmem:[%s1083] sm:$0xff] %vm77, %v1081
    %1086 = vrot.lane.b32.xlu0 %v1065, 96
    %v1087 = vpop.permute.xlu0 %1086
    %s1089 = scalar_lea.vmem [#allocation6], 8
    %1090 = vst.msk [vmem:[%s1089] sm:$0xff] %vm77, %v1087
    // Predicated region
    $region26: #{tpu_custom_call.1} parent=1 // pred_check
      _
    $region27: #{tpu_custom_call.1} parent=1 // pred_check_branch
      %1092 = sbr.rel (0) target = $region29
    $region28: #{tpu_custom_call.1} parent=1 // pred_region
      %1094 = vsyncadd [#allocation4], 0
      %s1095 = sshll.u32 [#allocation5], 4
      %s1096 = int_to_ptr.vmem [resolvable:$true] %s1095
      %s1097 = sshll.u32 %s5, 4
      %s1098 = int_to_ptr.hbm [resolvable:$true] %s1097
      %1103 = dma.vmem_to_hbm [thread:$0]  %s1096, 256, %s1098, [#allocation4], 128, 128, 8
    $region29: #{tpu_custom_call.1} parent=1 // pred_fallthru
      _
    // Predicated region
    $region30: #{tpu_custom_call.1} parent=1 // pred_check
      _
    $region31: #{tpu_custom_call.1} parent=1 // pred_check_branch
      %1105 = sbr.rel (0) target = $region33
    $region32: #{tpu_custom_call.1} parent=1 // pred_region
      %1107 = vsyncadd [#allocation7], 0
      %s1108 = sshll.u32 [#allocation6], 4
      %s1109 = int_to_ptr.vmem [resolvable:$true] %s1108
      %s1110 = sshll.u32 %s6, 4
      %s1111 = int_to_ptr.hbm [resolvable:$true] %s1110
      %1116 = dma.vmem_to_hbm [thread:$0]  %s1109, 256, %s1111, [#allocation7], 128, 128, 8
    $region33: #{tpu_custom_call.1} parent=1 // pred_fallthru
      _
    // Predicated region
    $region34: #{tpu_custom_call.1} parent=1 // pred_check
      _
    $region35: #{tpu_custom_call.1} parent=1 // pred_check_branch
      %1118 = sbr.rel (0) target = $region37
    $region36: #{tpu_custom_call.1} parent=1 // pred_region
      %1120 = dma.done [#allocation4], 256
    $region37: #{tpu_custom_call.1} parent=1 // pred_fallthru
      _
    // Predicated region
    $region38: #{tpu_custom_call.1} parent=1 // pred_check
      _
    $region39: #{tpu_custom_call.1} parent=1 // pred_check_branch
      %1122 = sbr.rel (0) target = $region41
    $region40: #{tpu_custom_call.1} parent=1 // pred_region
      %1124 = dma.done [#allocation7], 256
    $region41: #{tpu_custom_call.1} parent=1 // pred_fallthru
      _
    %1125 = vsyncpa [#allocation3], 1
    %1126 = vsyncpa [#allocation4], 1
    %1127 = vsyncpa [#allocation7], 1

</llo_original>
